<compile_context>
chip_gen: v7x
topology: tpu7x:2x2x1
jax: 0.10.0
libtpu: 0.0.40
codegen_flags: <defaults>
</compile_context>

<pallas_src>
import functools

import jax
import jax.numpy as jnp
from jax import lax
from jax.experimental import pallas as pl
from jax.experimental.pallas import tpu as pltpu


def _classifier_head_kernel(x_ref, wconv_ref, bconv_ref, wfc_ref, bfc_ref,
                            out_ref, pooled_acc, *, inv_hw):
    # x_ref      : (1, 1, TH+2, W+2, Cin)  bf16  haloed spatial row-tile (NHWC)
    # wconv_ref  : (9, Cin, 256)           bf16  conv taps as (Cin -> Cout) matrices
    # bconv_ref  : (1, 256)                f32
    # wfc_ref    : (256, NCP)              f32   NCP = num_classes padded to 128
    # bfc_ref    : (1, NCP)                f32
    # out_ref    : (1, 1, NCP)             f32
    # pooled_acc : (1, 256)                f32   running spatial sum of relu(conv)
    t = pl.program_id(1)

    @pl.when(t == 0)
    def _():
        pooled_acc[...] = jnp.zeros_like(pooled_acc)

    x = x_ref[0, 0]                       # (TH+2, W+2, Cin)
    th = x.shape[0] - 2
    w = x.shape[1] - 2
    cin = x.shape[2]
    cout = wconv_ref.shape[2]

    # 3x3 conv over this row-tile as 9 shifted matmuls, accumulated in f32 on the MXU.
    acc = jnp.zeros((th * w, cout), jnp.float32)
    for kh in range(3):
        for kw in range(3):
            win = x[kh:kh + th, kw:kw + w, :].reshape(th * w, cin)
            acc = acc + jnp.dot(win, wconv_ref[kh * 3 + kw],
                                preferred_element_type=jnp.float32)

    conv = jnp.maximum(acc + bconv_ref[...], 0.0)                  # (TH*W, 256) f32
    pooled_acc[...] += jnp.sum(conv, axis=0, keepdims=True)        # incremental pool sum

    @pl.when(t == pl.num_programs(1) - 1)
    def _():
        pooled = pooled_acc[...] * inv_hw                          # mean == sum * (1/HW)
        logits = jnp.dot(pooled, wfc_ref[...],
                         preferred_element_type=jnp.float32) + bfc_ref[...]
        out_ref[0] = logits.astype(out_ref.dtype)


def classifier_head(x_nchw, w_conv, b_conv, w_fc, b_fc, *, tile_h=8):
    """x_nchw: (N, Cin, H, W) f32. w_conv: (256, Cin, 3, 3). w_fc: (NC, 256).
    Returns (N, NC) f32 logits matching the PyTorch module's forward."""
    n, cin, h, w = x_nchw.shape
    cout = w_conv.shape[0]                                  # 256
    num_classes = w_fc.shape[0]
    ncp = max(128, ((num_classes + 127) // 128) * 128)      # lane-dense output width

    if h % tile_h != 0:
        tile_h = h                                          # fall back: one tile per image
    n_t = h // tile_h

    # NCHW -> NHWC in bf16, pad=1 for the 3x3 conv.
    x = jnp.transpose(x_nchw, (0, 2, 3, 1)).astype(jnp.bfloat16)
    x_pad = jnp.pad(x, ((0, 0), (1, 1), (1, 1), (0, 0)))    # (N, H+2, W+2, Cin)

    # Haloed row tiles: (N, n_t, tile_h+2, W+2, Cin). Only 2 rows duplicated per tile
    # (vs 9x for im2col), so BlockSpec tiling never needs overlapping blocks.
    tiles = jnp.stack(
        [x_pad[:, t * tile_h:t * tile_h + tile_h + 2] for t in range(n_t)], axis=1)

    # Conv weight (Cout, Cin, KH, KW) -> (KH, KW, Cin, Cout) -> (9, Cin, Cout), bf16.
    wconv = jnp.transpose(w_conv, (2, 3, 1, 0)).reshape(9, cin, cout).astype(jnp.bfloat16)
    bconv = b_conv.reshape(1, cout).astype(jnp.float32)

    # FC weight (NC, 256) -> (256, NC), padded to (256, NCP); bias padded likewise.
    wfc = jnp.pad(jnp.transpose(w_fc, (1, 0)).astype(jnp.float32),
                  ((0, 0), (0, ncp - num_classes)))
    bfc = jnp.pad(b_fc.astype(jnp.float32), (0, ncp - num_classes)).reshape(1, ncp)

    kernel = functools.partial(_classifier_head_kernel, inv_hw=1.0 / float(h * w))

    flops = 2 * n * h * w * 9 * cin * cout + 2 * n * cout * ncp
    bytes_accessed = int(tiles.size) * 2 + int(wconv.size) * 2 + \
        (int(bconv.size) + int(wfc.size) + int(bfc.size) + n * ncp) * 4

    out = pl.pallas_call(
        kernel,
        out_shape=jax.ShapeDtypeStruct((n, 1, ncp), jnp.float32),
        grid_spec=pltpu.PrefetchScalarGridSpec(
            num_scalar_prefetch=0,
            grid=(n, n_t),            # batch = parallel, spatial tiles = reduction
            in_specs=[
                pl.BlockSpec((1, 1, tile_h + 2, w + 2, cin),
                             lambda b, t: (b, t, 0, 0, 0)),
                pl.BlockSpec((9, cin, cout), lambda b, t: (0, 0, 0)),
                pl.BlockSpec((1, cout), lambda b, t: (0, 0)),
                pl.BlockSpec((cout, ncp), lambda b, t: (0, 0)),
                pl.BlockSpec((1, ncp), lambda b, t: (0, 0)),
            ],
            out_specs=pl.BlockSpec((1, 1, ncp), lambda b, t: (b, 0, 0)),
            scratch_shapes=[pltpu.VMEM((1, cout), jnp.float32)],
        ),
        compiler_params=pltpu.CompilerParams(
            dimension_semantics=("parallel", "arbitrary"),
            vmem_limit_bytes=32 * 1024 * 1024,
        ),
        cost_estimate=pl.CostEstimate(flops=flops, transcendentals=0,
                                      bytes_accessed=bytes_accessed),
    )(tiles, wconv, bconv, wfc, bfc)

    return out.reshape(n, ncp)[:, :num_classes]


if __name__ == "__main__":
    # Small shapes consistent with the module.
    N, CIN, H, W = 2, 4, 16, 16
    CMID = 256                # fixed by the module (Conv2d out channels)
    NUM_CLASSES = 10

    key = jax.random.PRNGKey(0)
    kx, kwc, kbc, kwf, kbf = jax.random.split(key, 5)

    x = jax.random.normal(kx, (N, CIN, H, W), dtype=jnp.float32)
    w_conv = jax.random.normal(kwc, (CMID, CIN, 3, 3), dtype=jnp.float32) * 0.05
    b_conv = jax.random.normal(kbc, (CMID,), dtype=jnp.float32) * 0.05
    w_fc = jax.random.normal(kwf, (NUM_CLASSES, CMID), dtype=jnp.float32) * 0.05
    b_fc = jax.random.normal(kbf, (NUM_CLASSES,), dtype=jnp.float32) * 0.05

    out = classifier_head(x, w_conv, b_conv, w_fc, b_fc)
    jax.block_until_ready(out)

    # Pure-JAX reference of the same math. The kernel quantizes x / conv weight to bf16
    # (f32 accumulation), so the reference uses the same bf16-rounded values.
    x_q = x.astype(jnp.bfloat16).astype(jnp.float32)
    wc_q = w_conv.astype(jnp.bfloat16).astype(jnp.float32)
    x_nhwc = jnp.transpose(x_q, (0, 2, 3, 1))
    ref = lax.conv_general_dilated(
        x_nhwc, jnp.transpose(wc_q, (2, 3, 1, 0)),
        window_strides=(1, 1), padding="SAME",
        dimension_numbers=("NHWC", "HWIO", "NHWC"),
    ) + b_conv
    ref = jnp.maximum(ref, 0.0).mean(axis=(1, 2))                  # (N, 256)
    ref = ref @ jnp.transpose(w_fc, (1, 0)) + b_fc                 # (N, NUM_CLASSES)

    assert out.shape == (N, NUM_CLASSES)
    assert jnp.allclose(out, ref, atol=1e-3, rtol=1e-3), \
        f"max abs err = {jnp.max(jnp.abs(out - ref))}"
    print("KERNEL_OK")
</pallas_src>

<mosaic_0001>
module attributes {stable_mosaic.version = 11 : i64} {
  func.func @_classifier_head_kernel(%arg0: i32, %arg1: i32, %arg2: memref<1x1x10x18x4xbf16, #tpu.memory_space<vmem>>, %arg3: memref<9x4x256xbf16, #tpu.memory_space<vmem>>, %arg4: memref<1x256xf32, #tpu.memory_space<vmem>>, %arg5: memref<256x128xf32, #tpu.memory_space<vmem>>, %arg6: memref<1x128xf32, #tpu.memory_space<vmem>>, %arg7: memref<1x1x128xf32, #tpu.memory_space<vmem>>, %arg8: memref<1x256xf32, #tpu.memory_space<vmem>>) attributes {dimension_semantics = [#tpu.dimension_semantics<parallel>, #tpu.dimension_semantics<arbitrary>], iteration_bounds = array<i64: 2, 2>, scalar_prefetch = 0 : i64, scratch_operands = 1 : i64, tpu.core_type = #tpu.core_type<tc>, window_params = [{transform_indices = @transform_0, window_bounds = array<i64: 1, 1, 10, 18, 4>}, {pipeline_mode = #tpu.pipeline_mode<synchronous>, transform_indices = @transform_1, window_bounds = array<i64: 9, 4, 256>}, {pipeline_mode = #tpu.pipeline_mode<synchronous>, transform_indices = @transform_2, window_bounds = array<i64: 1, 256>}, {pipeline_mode = #tpu.pipeline_mode<synchronous>, transform_indices = @transform_3, window_bounds = array<i64: 256, 128>}, {pipeline_mode = #tpu.pipeline_mode<synchronous>, transform_indices = @transform_4, window_bounds = array<i64: 1, 128>}, {transform_indices = @transform_5, window_bounds = array<i64: 1, 1, 128>}]} {
    %c0_i32 = arith.constant 0 : i32
    %0 = arith.cmpi eq, %arg1, %c0_i32 : i32
    %1 = arith.extui %0 : i1 to i32
    %c0_i32_0 = arith.constant 0 : i32
    %2 = arith.cmpi ne, %1, %c0_i32_0 : i32
    scf.if %2 {
      %cst_42 = arith.constant 0.000000e+00 : f32
      %73 = vector.broadcast %cst_42 : f32 to vector<1x256xf32>
      %c0_43 = arith.constant 0 : index
      %c0_44 = arith.constant 0 : index
      %74 = vector.load %arg8[%c0_43, %c0_44] : memref<1x256xf32, #tpu.memory_space<vmem>>, vector<1x256xf32>
      tpu.vector_store %arg8[%c0_43, %c0_44], %73 {strides = array<i32>} : memref<1x256xf32, #tpu.memory_space<vmem>>, vector<1x256xf32>,
    } else {
    }
    %c0 = arith.constant 0 : index
    %c0_1 = arith.constant 0 : index
    %c0_2 = arith.constant 0 : index
    %c0_3 = arith.constant 0 : index
    %c0_4 = arith.constant 0 : index
    %3 = vector.load %arg2[%c0, %c0_1, %c0_2, %c0_3, %c0_4] : memref<1x1x10x18x4xbf16, #tpu.memory_space<vmem>>, vector<1x1x10x18x4xbf16>
    %4 = vector.shape_cast %3 : vector<1x1x10x18x4xbf16> to vector<10x18x4xbf16>
    %cst = arith.constant 0.000000e+00 : f32
    %5 = vector.broadcast %cst : f32 to vector<128x256xf32>
    %6 = vector.extract_strided_slice %4 {offsets = [0, 0, 0], sizes = [8, 16, 4], strides = [1, 1, 1]} : vector<10x18x4xbf16> to vector<8x16x4xbf16>
    %7 = vector.shape_cast %6 : vector<8x16x4xbf16> to vector<128x4xbf16>
    %c0_5 = arith.constant 0 : index
    %c0_6 = arith.constant 0 : index
    %c0_7 = arith.constant 0 : index
    %8 = vector.load %arg3[%c0_5, %c0_6, %c0_7] : memref<9x4x256xbf16, #tpu.memory_space<vmem>>, vector<1x4x256xbf16>
    %9 = vector.shape_cast %8 : vector<1x4x256xbf16> to vector<4x256xbf16>
    %cst_8 = arith.constant dense<0.000000e+00> : vector<128x256xf32>
    %10 = tpu.matmul %7, %9, %cst_8 {dimension_numbers = #tpu.dot_dimension_numbers<[1], [0], [0], [1], [0, 0, 1, 1], [], []>} : vector<128x4xbf16>, vector<4x256xbf16>, vector<128x256xf32> -> vector<128x256xf32>
    %11 = arith.addf %5, %10 : vector<128x256xf32>
    %12 = vector.extract_strided_slice %4 {offsets = [0, 1, 0], sizes = [8, 16, 4], strides = [1, 1, 1]} : vector<10x18x4xbf16> to vector<8x16x4xbf16>
    %13 = vector.shape_cast %12 : vector<8x16x4xbf16> to vector<128x4xbf16>
    %c1 = arith.constant 1 : index
    %c0_9 = arith.constant 0 : index
    %c0_10 = arith.constant 0 : index
    %14 = vector.load %arg3[%c1, %c0_9, %c0_10] : memref<9x4x256xbf16, #tpu.memory_space<vmem>>, vector<1x4x256xbf16>
    %15 = vector.shape_cast %14 : vector<1x4x256xbf16> to vector<4x256xbf16>
    %cst_11 = arith.constant dense<0.000000e+00> : vector<128x256xf32>
    %16 = tpu.matmul %13, %15, %cst_11 {dimension_numbers = #tpu.dot_dimension_numbers<[1], [0], [0], [1], [0, 0, 1, 1], [], []>} : vector<128x4xbf16>, vector<4x256xbf16>, vector<128x256xf32> -> vector<128x256xf32>
    %17 = arith.addf %11, %16 : vector<128x256xf32>
    %18 = vector.extract_strided_slice %4 {offsets = [0, 2, 0], sizes = [8, 16, 4], strides = [1, 1, 1]} : vector<10x18x4xbf16> to vector<8x16x4xbf16>
    %19 = vector.shape_cast %18 : vector<8x16x4xbf16> to vector<128x4xbf16>
    %c2 = arith.constant 2 : index
    %c0_12 = arith.constant 0 : index
    %c0_13 = arith.constant 0 : index
    %20 = vector.load %arg3[%c2, %c0_12, %c0_13] : memref<9x4x256xbf16, #tpu.memory_space<vmem>>, vector<1x4x256xbf16>
    %21 = vector.shape_cast %20 : vector<1x4x256xbf16> to vector<4x256xbf16>
    %cst_14 = arith.constant dense<0.000000e+00> : vector<128x256xf32>
    %22 = tpu.matmul %19, %21, %cst_14 {dimension_numbers = #tpu.dot_dimension_numbers<[1], [0], [0], [1], [0, 0, 1, 1], [], []>} : vector<128x4xbf16>, vector<4x256xbf16>, vector<128x256xf32> -> vector<128x256xf32>
    %23 = arith.addf %17, %22 : vector<128x256xf32>
    %24 = vector.extract_strided_slice %4 {offsets = [1, 0, 0], sizes = [8, 16, 4], strides = [1, 1, 1]} : vector<10x18x4xbf16> to vector<8x16x4xbf16>
    %25 = vector.shape_cast %24 : vector<8x16x4xbf16> to vector<128x4xbf16>
    %c3 = arith.constant 3 : index
    %c0_15 = arith.constant 0 : index
    %c0_16 = arith.constant 0 : index
    %26 = vector.load %arg3[%c3, %c0_15, %c0_16] : memref<9x4x256xbf16, #tpu.memory_space<vmem>>, vector<1x4x256xbf16>
    %27 = vector.shape_cast %26 : vector<1x4x256xbf16> to vector<4x256xbf16>
    %cst_17 = arith.constant dense<0.000000e+00> : vector<128x256xf32>
    %28 = tpu.matmul %25, %27, %cst_17 {dimension_numbers = #tpu.dot_dimension_numbers<[1], [0], [0], [1], [0, 0, 1, 1], [], []>} : vector<128x4xbf16>, vector<4x256xbf16>, vector<128x256xf32> -> vector<128x256xf32>
    %29 = arith.addf %23, %28 : vector<128x256xf32>
    %30 = vector.extract_strided_slice %4 {offsets = [1, 1, 0], sizes = [8, 16, 4], strides = [1, 1, 1]} : vector<10x18x4xbf16> to vector<8x16x4xbf16>
    %31 = vector.shape_cast %30 : vector<8x16x4xbf16> to vector<128x4xbf16>
    %c4 = arith.constant 4 : index
    %c0_18 = arith.constant 0 : index
    %c0_19 = arith.constant 0 : index
    %32 = vector.load %arg3[%c4, %c0_18, %c0_19] : memref<9x4x256xbf16, #tpu.memory_space<vmem>>, vector<1x4x256xbf16>
    %33 = vector.shape_cast %32 : vector<1x4x256xbf16> to vector<4x256xbf16>
    %cst_20 = arith.constant dense<0.000000e+00> : vector<128x256xf32>
    %34 = tpu.matmul %31, %33, %cst_20 {dimension_numbers = #tpu.dot_dimension_numbers<[1], [0], [0], [1], [0, 0, 1, 1], [], []>} : vector<128x4xbf16>, vector<4x256xbf16>, vector<128x256xf32> -> vector<128x256xf32>
    %35 = arith.addf %29, %34 : vector<128x256xf32>
    %36 = vector.extract_strided_slice %4 {offsets = [1, 2, 0], sizes = [8, 16, 4], strides = [1, 1, 1]} : vector<10x18x4xbf16> to vector<8x16x4xbf16>
    %37 = vector.shape_cast %36 : vector<8x16x4xbf16> to vector<128x4xbf16>
    %c5 = arith.constant 5 : index
    %c0_21 = arith.constant 0 : index
    %c0_22 = arith.constant 0 : index
    %38 = vector.load %arg3[%c5, %c0_21, %c0_22] : memref<9x4x256xbf16, #tpu.memory_space<vmem>>, vector<1x4x256xbf16>
    %39 = vector.shape_cast %38 : vector<1x4x256xbf16> to vector<4x256xbf16>
    %cst_23 = arith.constant dense<0.000000e+00> : vector<128x256xf32>
    %40 = tpu.matmul %37, %39, %cst_23 {dimension_numbers = #tpu.dot_dimension_numbers<[1], [0], [0], [1], [0, 0, 1, 1], [], []>} : vector<128x4xbf16>, vector<4x256xbf16>, vector<128x256xf32> -> vector<128x256xf32>
    %41 = arith.addf %35, %40 : vector<128x256xf32>
    %42 = vector.extract_strided_slice %4 {offsets = [2, 0, 0], sizes = [8, 16, 4], strides = [1, 1, 1]} : vector<10x18x4xbf16> to vector<8x16x4xbf16>
    %43 = vector.shape_cast %42 : vector<8x16x4xbf16> to vector<128x4xbf16>
    %c6 = arith.constant 6 : index
    %c0_24 = arith.constant 0 : index
    %c0_25 = arith.constant 0 : index
    %44 = vector.load %arg3[%c6, %c0_24, %c0_25] : memref<9x4x256xbf16, #tpu.memory_space<vmem>>, vector<1x4x256xbf16>
    %45 = vector.shape_cast %44 : vector<1x4x256xbf16> to vector<4x256xbf16>
    %cst_26 = arith.constant dense<0.000000e+00> : vector<128x256xf32>
    %46 = tpu.matmul %43, %45, %cst_26 {dimension_numbers = #tpu.dot_dimension_numbers<[1], [0], [0], [1], [0, 0, 1, 1], [], []>} : vector<128x4xbf16>, vector<4x256xbf16>, vector<128x256xf32> -> vector<128x256xf32>
    %47 = arith.addf %41, %46 : vector<128x256xf32>
    %48 = vector.extract_strided_slice %4 {offsets = [2, 1, 0], sizes = [8, 16, 4], strides = [1, 1, 1]} : vector<10x18x4xbf16> to vector<8x16x4xbf16>
    %49 = vector.shape_cast %48 : vector<8x16x4xbf16> to vector<128x4xbf16>
    %c7 = arith.constant 7 : index
    %c0_27 = arith.constant 0 : index
    %c0_28 = arith.constant 0 : index
    %50 = vector.load %arg3[%c7, %c0_27, %c0_28] : memref<9x4x256xbf16, #tpu.memory_space<vmem>>, vector<1x4x256xbf16>
    %51 = vector.shape_cast %50 : vector<1x4x256xbf16> to vector<4x256xbf16>
    %cst_29 = arith.constant dense<0.000000e+00> : vector<128x256xf32>
    %52 = tpu.matmul %49, %51, %cst_29 {dimension_numbers = #tpu.dot_dimension_numbers<[1], [0], [0], [1], [0, 0, 1, 1], [], []>} : vector<128x4xbf16>, vector<4x256xbf16>, vector<128x256xf32> -> vector<128x256xf32>
    %53 = arith.addf %47, %52 : vector<128x256xf32>
    %54 = vector.extract_strided_slice %4 {offsets = [2, 2, 0], sizes = [8, 16, 4], strides = [1, 1, 1]} : vector<10x18x4xbf16> to vector<8x16x4xbf16>
    %55 = vector.shape_cast %54 : vector<8x16x4xbf16> to vector<128x4xbf16>
    %c8 = arith.constant 8 : index
    %c0_30 = arith.constant 0 : index
    %c0_31 = arith.constant 0 : index
    %56 = vector.load %arg3[%c8, %c0_30, %c0_31] : memref<9x4x256xbf16, #tpu.memory_space<vmem>>, vector<1x4x256xbf16>
    %57 = vector.shape_cast %56 : vector<1x4x256xbf16> to vector<4x256xbf16>
    %cst_32 = arith.constant dense<0.000000e+00> : vector<128x256xf32>
    %58 = tpu.matmul %55, %57, %cst_32 {dimension_numbers = #tpu.dot_dimension_numbers<[1], [0], [0], [1], [0, 0, 1, 1], [], []>} : vector<128x4xbf16>, vector<4x256xbf16>, vector<128x256xf32> -> vector<128x256xf32>
    %59 = arith.addf %53, %58 : vector<128x256xf32>
    %c0_33 = arith.constant 0 : index
    %c0_34 = arith.constant 0 : index
    %60 = vector.load %arg4[%c0_33, %c0_34] : memref<1x256xf32, #tpu.memory_space<vmem>>, vector<1x256xf32>
    %61 = vector.broadcast %60 : vector<1x256xf32> to vector<128x256xf32>
    %62 = arith.addf %59, %61 : vector<128x256xf32>
    %cst_35 = arith.constant 0.000000e+00 : f32
    %63 = vector.broadcast %cst_35 : f32 to vector<128x256xf32>
    %64 = arith.maximumf %62, %63 : vector<128x256xf32>
    %c0_36 = arith.constant 0 : index
    %c0_37 = arith.constant 0 : index
    %65 = vector.load %arg8[%c0_36, %c0_37] : memref<1x256xf32, #tpu.memory_space<vmem>>, vector<1x256xf32>
    %cst_38 = arith.constant dense<0.000000e+00> : vector<256xf32>
    %66 = vector.multi_reduction <add>, %64, %cst_38 [0] : vector<128x256xf32> to vector<256xf32>
    %67 = vector.shape_cast %66 : vector<256xf32> to vector<1x256xf32>
    %68 = arith.addf %65, %67 : vector<1x256xf32>
    %c0_39 = arith.constant 0 : index
    %c0_40 = arith.constant 0 : index
    %69 = vector.load %arg8[%c0_39, %c0_40] : memref<1x256xf32, #tpu.memory_space<vmem>>, vector<1x256xf32>
    tpu.vector_store %arg8[%c0_39, %c0_40], %68 {strides = array<i32>} : memref<1x256xf32, #tpu.memory_space<vmem>>, vector<1x256xf32>,
    %c1_i32 = arith.constant 1 : i32
    %70 = arith.cmpi eq, %arg1, %c1_i32 : i32
    %71 = arith.extui %70 : i1 to i32
    %c0_i32_41 = arith.constant 0 : i32
    %72 = arith.cmpi ne, %71, %c0_i32_41 : i32
    scf.if %72 {
      %c0_42 = arith.constant 0 : index
      %c0_43 = arith.constant 0 : index
      %73 = vector.load %arg8[%c0_42, %c0_43] : memref<1x256xf32, #tpu.memory_space<vmem>>, vector<1x256xf32>
      %cst_44 = arith.constant 3.906250e-03 : f32
      %74 = vector.broadcast %cst_44 : f32 to vector<1x256xf32>
      %75 = arith.mulf %73, %74 : vector<1x256xf32>
      %c0_45 = arith.constant 0 : index
      %c0_46 = arith.constant 0 : index
      %76 = vector.load %arg5[%c0_45, %c0_46] : memref<256x128xf32, #tpu.memory_space<vmem>>, vector<256x128xf32>
      %cst_47 = arith.constant dense<0.000000e+00> : vector<1x128xf32>
      %77 = tpu.matmul %75, %76, %cst_47 {dimension_numbers = #tpu.dot_dimension_numbers<[1], [0], [0], [1], [0, 0, 1, 1], [], []>} : vector<1x256xf32>, vector<256x128xf32>, vector<1x128xf32> -> vector<1x128xf32>
      %c0_48 = arith.constant 0 : index
      %c0_49 = arith.constant 0 : index
      %78 = vector.load %arg6[%c0_48, %c0_49] : memref<1x128xf32, #tpu.memory_space<vmem>>, vector<1x128xf32>
      %79 = arith.addf %77, %78 : vector<1x128xf32>
      %c0_50 = arith.constant 0 : index
      %c0_51 = arith.constant 0 : index
      %c0_52 = arith.constant 0 : index
      %80 = vector.load %arg7[%c0_50, %c0_51, %c0_52] : memref<1x1x128xf32, #tpu.memory_space<vmem>>, vector<1x1x128xf32>
      %81 = vector.shape_cast %80 : vector<1x1x128xf32> to vector<1x128xf32>
      %82 = vector.shape_cast %79 : vector<1x128xf32> to vector<1x1x128xf32>
      tpu.vector_store %arg7[%c0_50, %c0_51, %c0_52], %82 {strides = array<i32>} : memref<1x1x128xf32, #tpu.memory_space<vmem>>, vector<1x1x128xf32>,
    } else {
    }
    return
  }
  func.func @transform_0(%arg0: i32, %arg1: i32) -> (i32, i32, i32, i32, i32) {
    %c0_i32 = arith.constant 0 : i32
    %c0_i32_0 = arith.constant 0 : i32
    %c0_i32_1 = arith.constant 0 : i32
    %c0_i32_2 = arith.constant 0 : i32
    return %arg0, %arg1, %c0_i32, %c0_i32_0, %c0_i32_1 : i32, i32, i32, i32, i32
  }
  func.func @transform_1(%arg0: i32, %arg1: i32) -> (i32, i32, i32) {
    %c0_i32 = arith.constant 0 : i32
    %c0_i32_0 = arith.constant 0 : i32
    %c0_i32_1 = arith.constant 0 : i32
    %c0_i32_2 = arith.constant 0 : i32
    return %c0_i32, %c0_i32_0, %c0_i32_1 : i32, i32, i32
  }
  func.func @transform_2(%arg0: i32, %arg1: i32) -> (i32, i32) {
    %c0_i32 = arith.constant 0 : i32
    %c0_i32_0 = arith.constant 0 : i32
    %c0_i32_1 = arith.constant 0 : i32
    return %c0_i32, %c0_i32_0 : i32, i32
  }
  func.func @transform_3(%arg0: i32, %arg1: i32) -> (i32, i32) {
    %c0_i32 = arith.constant 0 : i32
    %c0_i32_0 = arith.constant 0 : i32
    %c0_i32_1 = arith.constant 0 : i32
    return %c0_i32, %c0_i32_0 : i32, i32
  }
  func.func @transform_4(%arg0: i32, %arg1: i32) -> (i32, i32) {
    %c0_i32 = arith.constant 0 : i32
    %c0_i32_0 = arith.constant 0 : i32
    %c0_i32_1 = arith.constant 0 : i32
    return %c0_i32, %c0_i32_0 : i32, i32
  }
  func.func @transform_5(%arg0: i32, %arg1: i32) -> (i32, i32, i32) {
    %c0_i32 = arith.constant 0 : i32
    %c0_i32_0 = arith.constant 0 : i32
    %c0_i32_1 = arith.constant 0 : i32
    return %arg0, %c0_i32, %c0_i32_0 : i32, i32, i32
  }
}

</mosaic_0001>

<llo_original>
// kernel: tpu_custom_call.1
$region0: #{tpu_custom_call.1}
  #allocation0 [shape = 'u32[]', space=smem, size = 0x4, offset = 0x4, fixed_abs, tag = 'smem constant byte address 0x4 - core index']
  #allocation1 [shape = 'u32[144,128]{1,0:T(1,128)}', space=vmem, size = 0x12000, scoped, tag = 'internal scratch']
  #allocation2 [shape = 'f32[1,256]{1,0:T(1,128)}', space=vmem, size = 0x400, scoped, tag = 'scratch operand']
  %s0 = inlined_call_operand.vmem [shape: bf16[2,2,10,18,4], index: 0, kind: input, shape index: {}]
  %s1 = inlined_call_operand.vmem [shape: bf16[9,4,256], index: 1, kind: input, shape index: {}]
  %s2 = inlined_call_operand.vmem [shape: f32[1,256], index: 2, kind: input, shape index: {}]
  %s3 = inlined_call_operand.vmem [shape: f32[256,128], index: 3, kind: input, shape index: {}]
  %s4 = inlined_call_operand.vmem [shape: f32[1,128], index: 4, kind: input, shape index: {}]
  %s5 = inlined_call_operand.hbm [shape: f32[2,1,128], index: 5, kind: output, shape index: {}]
  %s6 = sld [smem:[#allocation0]]
  $region61: #{tpu_custom_call.1} parent=0
    _
  %s8 = ssub.s32 1, %s6
  %s9 = scalar_select 0, %s8, %s6
  $region1: #{tpu_custom_call.1} parent=0
    #allocation3 [shape = 'u8[1024]{0}', space=vmem, size = 0x400, scoped, tag = 'output window, operand 0']
    #allocation4 [shape = 's32[2]{0}', space=sflag, size = 0x8, scoped, tag = 'scoped memory for tpu_custom_call.1']
    %10 = vsyncpa [#allocation4], 0
    %s11 = scalar_lea.sflag [#allocation4], 1
    %12 = vsyncpa %s11, 0
    loop: start=0, step=1, limit=6
    $region2: #{tpu_custom_call.1} parent=1 // loop_pre_header
      _
    $region3: #{tpu_custom_call.1} parent=1 // loop_header
      %s14 = sphi 0, %s18
      %p15 = scmp.ge.s32.totalorder %s14, 6
      %s21 = sphi 0, %s33
      %s22 = sphi 0, %s29
      %s23 = sphi 0, %s21
      %s24 = sphi 0, %s22
      %s25 = sphi 0, %s23
      %s26 = sphi 0, %s24
      %s38 = sphi 0, %s40
      %s41 = sphi 0, %s38
      %s42 = sphi 0, %s41
      %s58 = sphi 0, %s42
      %s62 = sphi 0, %s62
      %s64 = sphi 0, %s62
      %s65 = sphi 0, %s64
      %s79 = sphi 0, %s65
      %s83 = sphi 0, %s83
      %s85 = sphi 0, %s83
      %s86 = sphi 0, %s85
      %s100 = sphi 0, %s86
      %s104 = sphi 0, %s104
      %s106 = sphi 0, %s104
      %s107 = sphi 0, %s106
      %s121 = sphi 0, %s107
      %s125 = sphi 0, %s125
      %s127 = sphi 0, %s125
      %s128 = sphi 0, %s127
      %s142 = sphi 0, %s128
      %s148 = sphi 0, %s150
      %s151 = sphi 0, %s148
      %s152 = sphi 0, %s151
      %s168 = sphi 0, %s152
    $region4: #{tpu_custom_call.1} parent=1 // loop_header_branch
      %17 = sbr.rel (%p15) target = $region8
    $region5: #{tpu_custom_call.1} parent=1 // loop_body
      %s19 = ssub.s32 %s14, 1
      %s20 = ssub.s32 %s14, 2
      %s27 = sadd.s32 1, %s22
      %p28 = scmp.ge.s32.totalorder %s27, 2
      %s29 = scalar_select %p28, 0, %s27
      %s30 = sadd.s32 1, %s21
      %s31 = scalar_select %p28, %s30, %s21
      %p32 = scmp.ge.s32.totalorder %s31, 2
      %s33 = scalar_select %p32, 0, %s31
      %s34 = ssub.s32 %s21, %s33
      %s35 = ssub.s32 %s22, %s29
      %s36 = sor.u32 %s34, %s35
      %p37 = scmp.eq.s32.totalorder %s36, 0
      %s39 = sadd.s32 %s38, 1
      %s40 = scalar_select %p37, %s38, %s39
      %p43 = pneg %p37
      %p44 = scmp.eq.s32.totalorder %s14, 3
      %p45 = por %p43, %p44
      %p46 = scmp.ne.s32.totalorder %s38, %s41
      %p47 = scmp.eq.s32.totalorder %s14, 0
      %p48 = por %p46, %p47
      %p49 = scmp.ne.s32.totalorder %s38, %s41
      %p50 = scmp.eq.s32.totalorder %s19, 3
      %p51 = por %p49, %p50
      %p52 = scmp.ne.s32.totalorder %s41, %s42
      %p53 = scmp.eq.s32.totalorder %s19, 0
      %p54 = por %p52, %p53
      %p55 = scmp.ne.s32.totalorder %s41, %s42
      %p56 = scmp.eq.s32.totalorder %s20, 3
      %p57 = por %p55, %p56
      %p59 = scmp.ne.s32.totalorder %s42, %s58
      %p60 = scmp.eq.s32.totalorder %s20, 0
      %p61 = por %p59, %p60
      %s63 = sadd.s32 %s62, 1
      %p66 = scmp.eq.s32.totalorder %s14, 3
      %p67 = scmp.ne.s32.totalorder %s62, %s64
      %p68 = scmp.eq.s32.totalorder %s14, 0
      %p69 = por %p67, %p68
      %p70 = scmp.ne.s32.totalorder %s62, %s64
      %p71 = scmp.eq.s32.totalorder %s19, 3
      %p72 = por %p70, %p71
      %p73 = scmp.ne.s32.totalorder %s64, %s65
      %p74 = scmp.eq.s32.totalorder %s19, 0
      %p75 = por %p73, %p74
      %p76 = scmp.ne.s32.totalorder %s64, %s65
      %p77 = scmp.eq.s32.totalorder %s20, 3
      %p78 = por %p76, %p77
      %p80 = scmp.ne.s32.totalorder %s65, %s79
      %p81 = scmp.eq.s32.totalorder %s20, 0
      %p82 = por %p80, %p81
      %s84 = sadd.s32 %s83, 1
      %p87 = scmp.eq.s32.totalorder %s14, 3
      %p88 = scmp.ne.s32.totalorder %s83, %s85
      %p89 = scmp.eq.s32.totalorder %s14, 0
      %p90 = por %p88, %p89
      %p91 = scmp.ne.s32.totalorder %s83, %s85
      %p92 = scmp.eq.s32.totalorder %s19, 3
      %p93 = por %p91, %p92
      %p94 = scmp.ne.s32.totalorder %s85, %s86
      %p95 = scmp.eq.s32.totalorder %s19, 0
      %p96 = por %p94, %p95
      %p97 = scmp.ne.s32.totalorder %s85, %s86
      %p98 = scmp.eq.s32.totalorder %s20, 3
      %p99 = por %p97, %p98
      %p101 = scmp.ne.s32.totalorder %s86, %s100
      %p102 = scmp.eq.s32.totalorder %s20, 0
      %p103 = por %p101, %p102
      %s105 = sadd.s32 %s104, 1
      %p108 = scmp.eq.s32.totalorder %s14, 3
      %p109 = scmp.ne.s32.totalorder %s104, %s106
      %p110 = scmp.eq.s32.totalorder %s14, 0
      %p111 = por %p109, %p110
      %p112 = scmp.ne.s32.totalorder %s104, %s106
      %p113 = scmp.eq.s32.totalorder %s19, 3
      %p114 = por %p112, %p113
      %p115 = scmp.ne.s32.totalorder %s106, %s107
      %p116 = scmp.eq.s32.totalorder %s19, 0
      %p117 = por %p115, %p116
      %p118 = scmp.ne.s32.totalorder %s106, %s107
      %p119 = scmp.eq.s32.totalorder %s20, 3
      %p120 = por %p118, %p119
      %p122 = scmp.ne.s32.totalorder %s107, %s121
      %p123 = scmp.eq.s32.totalorder %s20, 0
      %p124 = por %p122, %p123
      %s126 = sadd.s32 %s125, 1
      %p129 = scmp.eq.s32.totalorder %s14, 3
      %p130 = scmp.ne.s32.totalorder %s125, %s127
      %p131 = scmp.eq.s32.totalorder %s14, 0
      %p132 = por %p130, %p131
      %p133 = scmp.ne.s32.totalorder %s125, %s127
      %p134 = scmp.eq.s32.totalorder %s19, 3
      %p135 = por %p133, %p134
      %p136 = scmp.ne.s32.totalorder %s127, %s128
      %p137 = scmp.eq.s32.totalorder %s19, 0
      %p138 = por %p136, %p137
      %p139 = scmp.ne.s32.totalorder %s127, %s128
      %p140 = scmp.eq.s32.totalorder %s20, 3
      %p141 = por %p139, %p140
      %p143 = scmp.ne.s32.totalorder %s128, %s142
      %p144 = scmp.eq.s32.totalorder %s20, 0
      %p145 = por %p143, %p144
      %s146 = ssub.s32 %s21, %s33
      %p147 = scmp.eq.s32.totalorder %s146, 0
      %s149 = sadd.s32 %s148, 1
      %s150 = scalar_select %p147, %s148, %s149
      %p153 = pneg %p147
      %p154 = scmp.eq.s32.totalorder %s14, 3
      %p155 = por %p153, %p154
      %p156 = scmp.ne.s32.totalorder %s148, %s151
      %p157 = scmp.eq.s32.totalorder %s14, 0
      %p158 = por %p156, %p157
      %p159 = scmp.ne.s32.totalorder %s148, %s151
      %p160 = scmp.eq.s32.totalorder %s19, 3
      %p161 = por %p159, %p160
      %p162 = scmp.ne.s32.totalorder %s151, %s152
      %p163 = scmp.eq.s32.totalorder %s19, 0
      %p164 = por %p162, %p163
      %p165 = scmp.ne.s32.totalorder %s151, %s152
      %p166 = scmp.eq.s32.totalorder %s20, 3
      %p167 = por %p165, %p166
      %p169 = scmp.ne.s32.totalorder %s152, %s168
      %p170 = scmp.eq.s32.totalorder %s20, 0
      %p171 = por %p169, %p170
      %p172 = scmp.le.s32.totalorder 1, %s14
      %p173 = scmp.lt.s32.totalorder %s14, 5
      %p174 = pnand %p172, %p173
      %p175 = pneg %p174
      // Predicated region
      $region9: #{tpu_custom_call.1} parent=5 // pred_check
        _
      $region10: #{tpu_custom_call.1} parent=5 // pred_check_branch
        %177 = sbr.rel (%p174) target = $region12
      $region11: #{tpu_custom_call.1} parent=5 // pred_region
        %s178 = ssub.s32 %s14, 1
        // Predicated region
        $region13: #{tpu_custom_call.1} parent=11 // pred_check
          %p179 = pneg %p75
        $region14: #{tpu_custom_call.1} parent=11 // pred_check_branch
          %181 = sbr.rel (%p179) target = $region16
        $region15: #{tpu_custom_call.1} parent=11 // pred_region
          _
        $region16: #{tpu_custom_call.1} parent=11 // pred_fallthru
          _
        // Predicated region
        $region17: #{tpu_custom_call.1} parent=11 // pred_check
          %p182 = pneg %p96
        $region18: #{tpu_custom_call.1} parent=11 // pred_check_branch
          %184 = sbr.rel (%p182) target = $region20
        $region19: #{tpu_custom_call.1} parent=11 // pred_region
          _
        $region20: #{tpu_custom_call.1} parent=11 // pred_fallthru
          _
        // Predicated region
        $region21: #{tpu_custom_call.1} parent=11 // pred_check
          %p185 = pneg %p117
        $region22: #{tpu_custom_call.1} parent=11 // pred_check_branch
          %187 = sbr.rel (%p185) target = $region24
        $region23: #{tpu_custom_call.1} parent=11 // pred_region
          _
        $region24: #{tpu_custom_call.1} parent=11 // pred_fallthru
          _
        // Predicated region
        $region25: #{tpu_custom_call.1} parent=11 // pred_check
          %p188 = pneg %p138
        $region26: #{tpu_custom_call.1} parent=11 // pred_check_branch
          %190 = sbr.rel (%p188) target = $region28
        $region27: #{tpu_custom_call.1} parent=11 // pred_region
          _
        $region28: #{tpu_custom_call.1} parent=11 // pred_fallthru
          _
      $region12: #{tpu_custom_call.1} parent=5 // pred_fallthru
        _
      %p191 = scmp.lt.s32.totalorder %s14, 4
      // Predicated region
      $region29: #{tpu_custom_call.1} parent=5 // pred_check
        %p192 = pneg %p191
      $region30: #{tpu_custom_call.1} parent=5 // pred_check_branch
        %194 = sbr.rel (%p192) target = $region32
      $region31: #{tpu_custom_call.1} parent=5 // pred_region
        // Predicated region
        $region33: #{tpu_custom_call.1} parent=31 // pred_check
          %p195 = pneg %p48
        $region34: #{tpu_custom_call.1} parent=31 // pred_check_branch
          %197 = sbr.rel (%p195) target = $region36
        $region35: #{tpu_custom_call.1} parent=31 // pred_region
          %p198 = scmp.lt.s32.totalorder %s21, 1
          %s199 = scalar_select %p198, %s21, 1
          %p200 = scmp.lt.s32.totalorder %s22, 1
          %s201 = scalar_select %p200, %s22, 1
          %s202 = smul.addr %s201, 30
          %s203 = smul.addr %s199, 60
          %s204 = sadd.s32 %s202, %s203
          %s205 = smul.addr %s204, 4
          %s206 = scalar_lea.vmem %s0, %s205
        $region36: #{tpu_custom_call.1} parent=31 // pred_fallthru
          _
      $region32: #{tpu_custom_call.1} parent=5 // pred_fallthru
        _
      %p207 = scmp.le.s32.totalorder 1, %s14
      %p208 = scmp.lt.s32.totalorder %s14, 5
      %p209 = pnand %p207, %p208
      %p210 = pneg %p209
      // Predicated region
      $region37: #{tpu_custom_call.1} parent=5 // pred_check
        _
      $region38: #{tpu_custom_call.1} parent=5 // pred_check_branch
        %212 = sbr.rel (%p209) target = $region40
      $region39: #{tpu_custom_call.1} parent=5 // pred_region
        %s213 = ssub.s32 %s14, 1
        %p214 = scmp.lt.s32.totalorder %s23, 1
        %s215 = scalar_select %p214, %s23, 1
        %p216 = scmp.lt.s32.totalorder %s24, 1
        %s217 = scalar_select %p216, %s24, 1
        %s218 = smul.addr %s217, 30
        %s219 = smul.addr %s215, 60
        %s220 = sadd.s32 %s218, %s219
        %s221 = smul.addr %s220, 4
        %s222 = scalar_lea.vmem %s0, %s221
        %p223 = pneg %p54
        %p224 = pneg %p51
        %p225 = pneg %p75
        %p226 = pneg %p72
        %p227 = pneg %p96
        %p228 = pneg %p93
        %p229 = pneg %p117
        %p230 = pneg %p114
        %p231 = pneg %p138
        %p232 = pneg %p135
        %p233 = pneg %p164
        %p234 = pneg %p161
        %s235 = sand.u32 %s151, 1
        %s236 = scalar_lea.sflag [#allocation4], %s235
        %s237 = sand.u32 %s151, 1
        %s238 = scalar_lea.vmem [#allocation3], %s237
        %p239 = scmp.lt.s32.totalorder %s23, 1
        %s240 = scalar_select %p239, %s23, 1
        %p241 = scmp.lt.s32.totalorder %s24, 1
        %s242 = scalar_select %p241, %s24, 1
        %s243 = smul.addr %s242, 30
        %s244 = smul.addr %s240, 60
        %s245 = sadd.s32 %s243, %s244
        %s246 = smul.addr %s245, 4
        %s247 = scalar_lea.vmem %s0, %s246
        %p249 = scmp.eq.s32.totalorder %s24, 0
        // Predicated region
        $region41: #{tpu_custom_call.1} parent=39 // pred_check
          %p250 = pneg %p249
        $region42: #{tpu_custom_call.1} parent=39 // pred_check_branch
          %252 = sbr.rel (%p250) target = $region44
        $region43: #{tpu_custom_call.1} parent=39 // pred_region
          %v253 = vlaneseq
          %vm254 = vcmp.ge.s32.totalorder %v253, 0
          %vm255 = vcmp.lt.s32.totalorder %v253, 256
          %vm256 = vmand %vm254, %vm255
          %257 = vst.msk [vmem:[#allocation2] sm:$0x3] %vm256, 0.0
        $region44: #{tpu_custom_call.1} parent=39 // pred_fallthru
          _
        %v258 = vld [vmem:[%s247] sm:$0xf]
        %v259 = vld [vmem:[%s247 + $0x4] sm:$0xf]
        %v260 = vld [vmem:[%s247 + $0x8] sm:$0x1]
        %v261 = vld [vmem:[%s247 + $0xc] sm:$0xf]
        %v262 = vld [vmem:[%s247 + $0x10] sm:$0xf]
        %v263 = vld [vmem:[%s247 + $0x14] sm:$0x1]
        %v264 = vld [vmem:[%s247 + $0x18] sm:$0xf]
        %v265 = vld [vmem:[%s247 + $0x1c] sm:$0xf]
        %v266 = vld [vmem:[%s247 + $0x20] sm:$0x1]
        %v267 = vld [vmem:[%s247 + $0x24] sm:$0xf]
        %v268 = vld [vmem:[%s247 + $0x28] sm:$0xf]
        %v269 = vld [vmem:[%s247 + $0x2c] sm:$0x1]
        %v270 = vld [vmem:[%s247 + $0x30] sm:$0xf]
        %v271 = vld [vmem:[%s247 + $0x34] sm:$0xf]
        %v272 = vld [vmem:[%s247 + $0x38] sm:$0x1]
        %v273 = vld [vmem:[%s247 + $0x3c] sm:$0xf]
        %v274 = vld [vmem:[%s247 + $0x40] sm:$0xf]
        %v275 = vld [vmem:[%s247 + $0x44] sm:$0x1]
        %v276 = vld [vmem:[%s247 + $0x48] sm:$0xf]
        %v277 = vld [vmem:[%s247 + $0x4c] sm:$0xf]
        %v278 = vld [vmem:[%s247 + $0x50] sm:$0x1]
        %v279 = vld [vmem:[%s247 + $0x54] sm:$0xf]
        %v280 = vld [vmem:[%s247 + $0x58] sm:$0xf]
        %v281 = vld [vmem:[%s247 + $0x5c] sm:$0x1]
        %v282 = vld [vmem:[%s247 + $0x60] sm:$0xf]
        %v283 = vld [vmem:[%s247 + $0x64] sm:$0xf]
        %v284 = vld [vmem:[%s247 + $0x68] sm:$0x1]
        %v285 = vld [vmem:[%s247 + $0x6c] sm:$0xf]
        %v286 = vld [vmem:[%s247 + $0x70] sm:$0xf]
        %v287 = vld [vmem:[%s247 + $0x74] sm:$0x1]
        %v288 = vld [vmem:[%s1] sm:$0xf]
        %vm289 = vsmask.f32 3328
        %vm290 = vsmask.f32 7440
        %vm291 = vmor %vm289, %vm290
        %v293 = vshrl.u32 %v258, 16
        %v295 = vrot.slane %v293, 4
        %v296 = vshll.u32 %v258, 16
        %v298 = vrot.slane %v296, 5
        %v299 = vor.u32 %v295, %v298
        %v300 = vrot.slane %v299, 4
        %v302 = vshll.u32 %v259, 16
        %v304 = vrot.slane %v302, 5
        %v305 = vsel %vm291, %v300, %v304
        %v306 = vshrl.u32 %v259, 16
        %v308 = vrot.slane %v306, 4
        %v309 = vor.u32 %v308, %v304
        %v310 = vrot.slane %v309, 4
        %v312 = vshll.u32 %v260, 16
        %v314 = vrot.slane %v312, 5
        %v315 = vsel %vm291, %v310, %v314
        %v317 = vshrl.u32 %v261, 16
        %v319 = vrot.slane %v317, 4
        %v320 = vshll.u32 %v261, 16
        %v322 = vrot.slane %v320, 5
        %v323 = vor.u32 %v319, %v322
        %v324 = vrot.slane %v323, 4
        %v326 = vshll.u32 %v262, 16
        %v328 = vrot.slane %v326, 5
        %v329 = vsel %vm291, %v324, %v328
        %v330 = vshrl.u32 %v262, 16
        %v332 = vrot.slane %v330, 4
        %v333 = vor.u32 %v332, %v328
        %v334 = vrot.slane %v333, 4
        %v336 = vshll.u32 %v263, 16
        %v338 = vrot.slane %v336, 5
        %v339 = vsel %vm291, %v334, %v338
        %v341 = vshrl.u32 %v264, 16
        %v343 = vrot.slane %v341, 4
        %v344 = vshll.u32 %v264, 16
        %v346 = vrot.slane %v344, 5
        %v347 = vor.u32 %v343, %v346
        %v348 = vrot.slane %v347, 4
        %v350 = vshll.u32 %v265, 16
        %v352 = vrot.slane %v350, 5
        %v353 = vsel %vm291, %v348, %v352
        %v354 = vshrl.u32 %v265, 16
        %v356 = vrot.slane %v354, 4
        %v357 = vor.u32 %v356, %v352
        %v358 = vrot.slane %v357, 4
        %v360 = vshll.u32 %v266, 16
        %v362 = vrot.slane %v360, 5
        %v363 = vsel %vm291, %v358, %v362
        %v365 = vshrl.u32 %v267, 16
        %v367 = vrot.slane %v365, 4
        %v368 = vshll.u32 %v267, 16
        %v370 = vrot.slane %v368, 5
        %v371 = vor.u32 %v367, %v370
        %v372 = vrot.slane %v371, 4
        %v374 = vshll.u32 %v268, 16
        %v376 = vrot.slane %v374, 5
        %v377 = vsel %vm291, %v372, %v376
        %v378 = vshrl.u32 %v268, 16
        %v380 = vrot.slane %v378, 4
        %v381 = vor.u32 %v380, %v376
        %v382 = vrot.slane %v381, 4
        %v384 = vshll.u32 %v269, 16
        %v386 = vrot.slane %v384, 5
        %v387 = vsel %vm291, %v382, %v386
        %v389 = vshrl.u32 %v270, 16
        %v391 = vrot.slane %v389, 4
        %v392 = vshll.u32 %v270, 16
        %v394 = vrot.slane %v392, 5
        %v395 = vor.u32 %v391, %v394
        %v396 = vrot.slane %v395, 4
        %v398 = vshll.u32 %v271, 16
        %v400 = vrot.slane %v398, 5
        %v401 = vsel %vm291, %v396, %v400
        %v402 = vshrl.u32 %v271, 16
        %v404 = vrot.slane %v402, 4
        %v405 = vor.u32 %v404, %v400
        %v406 = vrot.slane %v405, 4
        %v408 = vshll.u32 %v272, 16
        %v410 = vrot.slane %v408, 5
        %v411 = vsel %vm291, %v406, %v410
        %v413 = vshrl.u32 %v273, 16
        %v415 = vrot.slane %v413, 4
        %v416 = vshll.u32 %v273, 16
        %v418 = vrot.slane %v416, 5
        %v419 = vor.u32 %v415, %v418
        %v420 = vrot.slane %v419, 4
        %v422 = vshll.u32 %v274, 16
        %v424 = vrot.slane %v422, 5
        %v425 = vsel %vm291, %v420, %v424
        %v426 = vshrl.u32 %v274, 16
        %v428 = vrot.slane %v426, 4
        %v429 = vor.u32 %v428, %v424
        %v430 = vrot.slane %v429, 4
        %v432 = vshll.u32 %v275, 16
        %v434 = vrot.slane %v432, 5
        %v435 = vsel %vm291, %v430, %v434
        %v437 = vshrl.u32 %v276, 16
        %v439 = vrot.slane %v437, 4
        %v440 = vshll.u32 %v276, 16
        %v442 = vrot.slane %v440, 5
        %v443 = vor.u32 %v439, %v442
        %v444 = vrot.slane %v443, 4
        %v446 = vshll.u32 %v277, 16
        %v448 = vrot.slane %v446, 5
        %v449 = vsel %vm291, %v444, %v448
        %v450 = vshrl.u32 %v277, 16
        %v452 = vrot.slane %v450, 4
        %v453 = vor.u32 %v452, %v448
        %v454 = vrot.slane %v453, 4
        %v456 = vshll.u32 %v278, 16
        %v458 = vrot.slane %v456, 5
        %v459 = vsel %vm291, %v454, %v458
        %v461 = vshrl.u32 %v279, 16
        %v463 = vrot.slane %v461, 4
        %v464 = vshll.u32 %v279, 16
        %v466 = vrot.slane %v464, 5
        %v467 = vor.u32 %v463, %v466
        %v468 = vrot.slane %v467, 4
        %v470 = vshll.u32 %v280, 16
        %v472 = vrot.slane %v470, 5
        %v473 = vsel %vm291, %v468, %v472
        %v474 = vshrl.u32 %v280, 16
        %v476 = vrot.slane %v474, 4
        %v477 = vor.u32 %v476, %v472
        %v478 = vrot.slane %v477, 4
        %v480 = vshll.u32 %v281, 16
        %v482 = vrot.slane %v480, 5
        %v483 = vsel %vm291, %v478, %v482
        %s484 = scalar_lea.vmem %s1, 4
        %v485 = vld [vmem:[%s484] sm:$0xf]
        %v486 = vunpack.c.l.b16 %v305
        %v487 = vunpack.c.l.b16 %v315
        %v488 = vunpack.c.l.b16 %v329
        %v489 = vunpack.c.l.b16 %v339
        %v490 = vunpack.c.l.b16 %v353
        %v491 = vunpack.c.l.b16 %v363
        %v492 = vunpack.c.l.b16 %v377
        %v493 = vunpack.c.l.b16 %v387
        %v494 = vunpack.c.l.b16 %v401
        %v495 = vunpack.c.l.b16 %v411
        %v496 = vunpack.c.l.b16 %v425
        %v497 = vunpack.c.l.b16 %v435
        %v498 = vunpack.c.l.b16 %v449
        %v499 = vunpack.c.l.b16 %v459
        %v500 = vunpack.c.l.b16 %v473
        %v501 = vunpack.c.l.b16 %v483
        %v502 = vpack.c.b16 %v487, %v486
        %v503 = vpack.c.b16 %v489, %v488
        %v504 = vpack.c.b16 %v491, %v490
        %v505 = vpack.c.b16 %v493, %v492
        %v506 = vpack.c.b16 %v495, %v494
        %v507 = vpack.c.b16 %v497, %v496
        %v508 = vpack.c.b16 %v499, %v498
        %v509 = vpack.c.b16 %v501, %v500
        %v512 = vunpack.c.l.s4 1983009808
        %v513 = vunpack.c.0.s8 %v512
        %v514 = vlaneseq
        %v515 = vshrl.u32 %v514, 7
        %v516 = vsub.s32 %v513, %v515
        %v517 = vrot.slane %v485, %v516
        %v518 = vcombine.high %v517, %v517
        %vm519 = vcmask 31744
        %v521 = vsel %vm519, %v502, 0
        %v524 = vsel %vm519, %v503, 0
        %v527 = vsel %vm519, %v504, 0
        %v530 = vsel %vm519, %v505, 0
        %v533 = vsel %vm519, %v506, 0
        %v536 = vsel %vm519, %v507, 0
        %v539 = vsel %vm519, %v508, 0
        %v542 = vsel %vm519, %v509, 0
        %vm544 = vcmask 1041408
        %v546 = vsel %vm544, %v517, 0
        %v549 = vsel %vm544, %v518, 0
        %551 = vmatprep.subr.bf16.mxu0 %v549
        %552 = vmatpush1.bf16.msra.mxu0 %v546
        %553 = vmatprep.subr.bf16.mxu0 0
        %554 = vmatpush1.bf16.msra.mxu0 0
        %555 = vmatprep.subr.bf16.mxu0 0
        %556 = vmatpush1.bf16.msra.mxu0 0
        %557 = vmatprep.subr.bf16.mxu0 0
        %558 = vmatpush1.bf16.msra.mxu0 0
        %559 = vmatprep.subr.bf16.mxu0 0
        %560 = vmatpush1.bf16.msra.mxu0 0
        %561 = vmatprep.subr.bf16.mxu0 0
        %562 = vmatpush1.bf16.msra.mxu0 0
        %563 = vmatprep.subr.bf16.mxu0 0
        %564 = vmatpush1.bf16.msra.mxu0 0
        %565 = vmatprep.subr.bf16.mxu0 0
        %566 = vmatpush1.bf16.msra.mxu0 0
        %567 = vmatprep.subr.bf16.mxu0 0
        %568 = vmatpush1.bf16.msra.mxu0 0
        %569 = vmatprep.subr.bf16.mxu0 0
        %570 = vmatpush1.bf16.msra.mxu0 0
        %571 = vmatprep.subr.bf16.mxu0 0
        %572 = vmatpush1.bf16.msra.mxu0 0
        %573 = vmatprep.subr.bf16.mxu0 0
        %574 = vmatpush1.bf16.msra.mxu0 0
        %575 = vmatprep.subr.bf16.mxu0 0
        %576 = vmatpush1.bf16.msra.mxu0 0
        %577 = vmatprep.subr.bf16.mxu0 0
        %578 = vmatpush1.bf16.msra.mxu0 0
        %579 = vmatprep.subr.bf16.mxu0 0
        %580 = vmatpush1.bf16.msra.mxu0 0
        %581 = vmatprep.subr.bf16.mxu0 0
        %582 = vmatpush1.bf16.msra.mxu0 0
        %583 = vmatprep.mubr.bf16.mxu0 0
        %584 = vmatmul.mubr.bf16.gmra.mrb[0].mxu0 %v521
        %v585 = vpop.f32.mrb[0].mxu0
        %v586 = vadd.f32 0.0, %v585
        %v587 = vpop.f32.mrb[0].mxu0
        %v588 = vadd.f32 0.0, %v587
        %v589 = vpop.f32.mrb[0].mxu0
        %v590 = vadd.f32 0.0, %v589
        %v591 = vpop.f32.mrb[0].mxu0
        %v592 = vadd.f32 0.0, %v591
        %593 = vmatprep.mubr.bf16.mxu0 0
        %594 = vmatmul.mubr.bf16.gmra.mrb[0].mxu0 %v524
        %v595 = vpop.f32.mrb[0].mxu0
        %v596 = vadd.f32 0.0, %v595
        %v597 = vpop.f32.mrb[0].mxu0
        %v598 = vadd.f32 0.0, %v597
        %v599 = vpop.f32.mrb[0].mxu0
        %v600 = vadd.f32 0.0, %v599
        %v601 = vpop.f32.mrb[0].mxu0
        %v602 = vadd.f32 0.0, %v601
        %603 = vmatprep.mubr.bf16.mxu0 0
        %604 = vmatmul.mubr.bf16.gmra.mrb[0].mxu0 %v527
        %v605 = vpop.f32.mrb[0].mxu0
        %v606 = vadd.f32 0.0, %v605
        %v607 = vpop.f32.mrb[0].mxu0
        %v608 = vadd.f32 0.0, %v607
        %v609 = vpop.f32.mrb[0].mxu0
        %v610 = vadd.f32 0.0, %v609
        %v611 = vpop.f32.mrb[0].mxu0
        %v612 = vadd.f32 0.0, %v611
        %613 = vmatprep.mubr.bf16.mxu0 0
        %614 = vmatmul.mubr.bf16.gmra.mrb[0].mxu0 %v530
        %v615 = vpop.f32.mrb[0].mxu0
        %v616 = vadd.f32 0.0, %v615
        %v617 = vpop.f32.mrb[0].mxu0
        %v618 = vadd.f32 0.0, %v617
        %v619 = vpop.f32.mrb[0].mxu0
        %v620 = vadd.f32 0.0, %v619
        %v621 = vpop.f32.mrb[0].mxu0
        %v622 = vadd.f32 0.0, %v621
        %623 = vmatprep.mubr.bf16.mxu0 0
        %624 = vmatmul.mubr.bf16.gmra.mrb[0].mxu0 %v533
        %v625 = vpop.f32.mrb[0].mxu0
        %v626 = vadd.f32 0.0, %v625
        %v627 = vpop.f32.mrb[0].mxu0
        %v628 = vadd.f32 0.0, %v627
        %v629 = vpop.f32.mrb[0].mxu0
        %v630 = vadd.f32 0.0, %v629
        %v631 = vpop.f32.mrb[0].mxu0
        %v632 = vadd.f32 0.0, %v631
        %633 = vmatprep.mubr.bf16.mxu0 0
        %634 = vmatmul.mubr.bf16.gmra.mrb[0].mxu0 %v536
        %v635 = vpop.f32.mrb[0].mxu0
        %v636 = vadd.f32 0.0, %v635
        %v637 = vpop.f32.mrb[0].mxu0
        %v638 = vadd.f32 0.0, %v637
        %v639 = vpop.f32.mrb[0].mxu0
        %v640 = vadd.f32 0.0, %v639
        %v641 = vpop.f32.mrb[0].mxu0
        %v642 = vadd.f32 0.0, %v641
        %643 = vmatprep.mubr.bf16.mxu0 0
        %644 = vmatmul.mubr.bf16.gmra.mrb[0].mxu0 %v539
        %v645 = vpop.f32.mrb[0].mxu0
        %v646 = vadd.f32 0.0, %v645
        %v647 = vpop.f32.mrb[0].mxu0
        %v648 = vadd.f32 0.0, %v647
        %v649 = vpop.f32.mrb[0].mxu0
        %v650 = vadd.f32 0.0, %v649
        %v651 = vpop.f32.mrb[0].mxu0
        %v652 = vadd.f32 0.0, %v651
        %653 = vmatprep.mubr.bf16.mxu0 0
        %654 = vmatmul.mubr.bf16.gmra.mrb[0].mxu0 %v542
        %v655 = vpop.f32.mrb[0].mxu0
        %v656 = vadd.f32 0.0, %v655
        %v657 = vpop.f32.mrb[0].mxu0
        %v658 = vadd.f32 0.0, %v657
        %v659 = vpop.f32.mrb[0].mxu0
        %v660 = vadd.f32 0.0, %v659
        %v661 = vpop.f32.mrb[0].mxu0
        %v662 = vadd.f32 0.0, %v661
        %663 = vdwg.mxu0
        %v680 = vunpack.c.l.b16 %v258
        %v681 = vunpack.c.l.b16 %v259
        %v682 = vunpack.c.l.b16 %v261
        %v683 = vunpack.c.l.b16 %v262
        %v684 = vunpack.c.l.b16 %v264
        %v685 = vunpack.c.l.b16 %v265
        %v686 = vunpack.c.l.b16 %v267
        %v687 = vunpack.c.l.b16 %v268
        %v688 = vunpack.c.l.b16 %v270
        %v689 = vunpack.c.l.b16 %v271
        %v690 = vunpack.c.l.b16 %v273
        %v691 = vunpack.c.l.b16 %v274
        %v692 = vunpack.c.l.b16 %v276
        %v693 = vunpack.c.l.b16 %v277
        %v694 = vunpack.c.l.b16 %v279
        %v695 = vunpack.c.l.b16 %v280
        %v696 = vpack.c.b16 %v681, %v680
        %v697 = vpack.c.b16 %v683, %v682
        %v698 = vpack.c.b16 %v685, %v684
        %v699 = vpack.c.b16 %v687, %v686
        %v700 = vpack.c.b16 %v689, %v688
        %v701 = vpack.c.b16 %v691, %v690
        %v702 = vpack.c.b16 %v693, %v692
        %v703 = vpack.c.b16 %v695, %v694
        %v706 = vunpack.c.l.s4 1983009808
        %v707 = vunpack.c.0.s8 %v706
        %v708 = vlaneseq
        %v709 = vshrl.u32 %v708, 7
        %v710 = vsub.s32 %v707, %v709
        %v711 = vrot.slane %v288, %v710
        %v712 = vcombine.high %v711, %v711
        %v714 = vsel %vm519, %v696, 0
        %v717 = vsel %vm519, %v697, 0
        %v720 = vsel %vm519, %v698, 0
        %v723 = vsel %vm519, %v699, 0
        %v726 = vsel %vm519, %v700, 0
        %v729 = vsel %vm519, %v701, 0
        %v732 = vsel %vm519, %v702, 0
        %v735 = vsel %vm519, %v703, 0
        %v738 = vsel %vm544, %v711, 0
        %v741 = vsel %vm544, %v712, 0
        %743 = vmatprep.subr.bf16.mxu0 %v741
        %744 = vmatpush1.bf16.msra.mxu0 %v738
        %745 = vmatprep.subr.bf16.mxu0 0
        %746 = vmatpush1.bf16.msra.mxu0 0
        %747 = vmatprep.subr.bf16.mxu0 0
        %748 = vmatpush1.bf16.msra.mxu0 0
        %749 = vmatprep.subr.bf16.mxu0 0
        %750 = vmatpush1.bf16.msra.mxu0 0
        %751 = vmatprep.subr.bf16.mxu0 0
        %752 = vmatpush1.bf16.msra.mxu0 0
        %753 = vmatprep.subr.bf16.mxu0 0
        %754 = vmatpush1.bf16.msra.mxu0 0
        %755 = vmatprep.subr.bf16.mxu0 0
        %756 = vmatpush1.bf16.msra.mxu0 0
        %757 = vmatprep.subr.bf16.mxu0 0
        %758 = vmatpush1.bf16.msra.mxu0 0
        %759 = vmatprep.subr.bf16.mxu0 0
        %760 = vmatpush1.bf16.msra.mxu0 0
        %761 = vmatprep.subr.bf16.mxu0 0
        %762 = vmatpush1.bf16.msra.mxu0 0
        %763 = vmatprep.subr.bf16.mxu0 0
        %764 = vmatpush1.bf16.msra.mxu0 0
        %765 = vmatprep.subr.bf16.mxu0 0
        %766 = vmatpush1.bf16.msra.mxu0 0
        %767 = vmatprep.subr.bf16.mxu0 0
        %768 = vmatpush1.bf16.msra.mxu0 0
        %769 = vmatprep.subr.bf16.mxu0 0
        %770 = vmatpush1.bf16.msra.mxu0 0
        %771 = vmatprep.subr.bf16.mxu0 0
        %772 = vmatpush1.bf16.msra.mxu0 0
        %773 = vmatprep.subr.bf16.mxu0 0
        %774 = vmatpush1.bf16.msra.mxu0 0
        %775 = vmatprep.mubr.bf16.mxu0 0
        %776 = vmatmul.mubr.bf16.gmra.mrb[0].mxu0 %v714
        %v777 = vpop.f32.mrb[0].mxu0
        %v778 = vadd.f32 %v586, %v777
        %v779 = vpop.f32.mrb[0].mxu0
        %v780 = vadd.f32 %v588, %v779
        %v781 = vpop.f32.mrb[0].mxu0
        %v782 = vadd.f32 %v590, %v781
        %v783 = vpop.f32.mrb[0].mxu0
        %v784 = vadd.f32 %v592, %v783
        %785 = vmatprep.mubr.bf16.mxu0 0
        %786 = vmatmul.mubr.bf16.gmra.mrb[0].mxu0 %v717
        %v787 = vpop.f32.mrb[0].mxu0
        %v788 = vadd.f32 %v596, %v787
        %v789 = vpop.f32.mrb[0].mxu0
        %v790 = vadd.f32 %v598, %v789
        %v791 = vpop.f32.mrb[0].mxu0
        %v792 = vadd.f32 %v600, %v791
        %v793 = vpop.f32.mrb[0].mxu0
        %v794 = vadd.f32 %v602, %v793
        %795 = vmatprep.mubr.bf16.mxu0 0
        %796 = vmatmul.mubr.bf16.gmra.mrb[0].mxu0 %v720
        %v797 = vpop.f32.mrb[0].mxu0
        %v798 = vadd.f32 %v606, %v797
        %v799 = vpop.f32.mrb[0].mxu0
        %v800 = vadd.f32 %v608, %v799
        %v801 = vpop.f32.mrb[0].mxu0
        %v802 = vadd.f32 %v610, %v801
        %v803 = vpop.f32.mrb[0].mxu0
        %v804 = vadd.f32 %v612, %v803
        %805 = vmatprep.mubr.bf16.mxu0 0
        %806 = vmatmul.mubr.bf16.gmra.mrb[0].mxu0 %v723
        %v807 = vpop.f32.mrb[0].mxu0
        %v808 = vadd.f32 %v616, %v807
        %v809 = vpop.f32.mrb[0].mxu0
        %v810 = vadd.f32 %v618, %v809
        %v811 = vpop.f32.mrb[0].mxu0
        %v812 = vadd.f32 %v620, %v811
        %v813 = vpop.f32.mrb[0].mxu0
        %v814 = vadd.f32 %v622, %v813
        %815 = vmatprep.mubr.bf16.mxu0 0
        %816 = vmatmul.mubr.bf16.gmra.mrb[0].mxu0 %v726
        %v817 = vpop.f32.mrb[0].mxu0
        %v818 = vadd.f32 %v626, %v817
        %v819 = vpop.f32.mrb[0].mxu0
        %v820 = vadd.f32 %v628, %v819
        %v821 = vpop.f32.mrb[0].mxu0
        %v822 = vadd.f32 %v630, %v821
        %v823 = vpop.f32.mrb[0].mxu0
        %v824 = vadd.f32 %v632, %v823
        %825 = vmatprep.mubr.bf16.mxu0 0
        %826 = vmatmul.mubr.bf16.gmra.mrb[0].mxu0 %v729
        %v827 = vpop.f32.mrb[0].mxu0
        %v828 = vadd.f32 %v636, %v827
        %v829 = vpop.f32.mrb[0].mxu0
        %v830 = vadd.f32 %v638, %v829
        %v831 = vpop.f32.mrb[0].mxu0
        %v832 = vadd.f32 %v640, %v831
        %v833 = vpop.f32.mrb[0].mxu0
        %v834 = vadd.f32 %v642, %v833
        %835 = vmatprep.mubr.bf16.mxu0 0
        %836 = vmatmul.mubr.bf16.gmra.mrb[0].mxu0 %v732
        %v837 = vpop.f32.mrb[0].mxu0
        %v838 = vadd.f32 %v646, %v837
        %v839 = vpop.f32.mrb[0].mxu0
        %v840 = vadd.f32 %v648, %v839
        %v841 = vpop.f32.mrb[0].mxu0
        %v842 = vadd.f32 %v650, %v841
        %v843 = vpop.f32.mrb[0].mxu0
        %v844 = vadd.f32 %v652, %v843
        %845 = vmatprep.mubr.bf16.mxu0 0
        %846 = vmatmul.mubr.bf16.gmra.mrb[0].mxu0 %v735
        %v847 = vpop.f32.mrb[0].mxu0
        %v848 = vadd.f32 %v656, %v847
        %v849 = vpop.f32.mrb[0].mxu0
        %v850 = vadd.f32 %v658, %v849
        %v851 = vpop.f32.mrb[0].mxu0
        %v852 = vadd.f32 %v660, %v851
        %v853 = vpop.f32.mrb[0].mxu0
        %v854 = vadd.f32 %v662, %v853
        %855 = vdwg.mxu0
        %vm864 = vcmask 1042432
        %vm865 = vcmask 1046532
        %vm866 = vmor %vm864, %vm865
        %v867 = vrot.slane %v258, 5
        %v868 = vrot.slane %v867, 4
        %v869 = vrot.slane %v259, 5
        %v870 = vsel %vm866, %v868, %v869
        %v871 = vrot.slane %v869, 4
        %v872 = vrot.slane %v260, 5
        %v873 = vsel %vm866, %v871, %v872
        %v874 = vrot.slane %v261, 5
        %v875 = vrot.slane %v874, 4
        %v876 = vrot.slane %v262, 5
        %v877 = vsel %vm866, %v875, %v876
        %v878 = vrot.slane %v876, 4
        %v879 = vrot.slane %v263, 5
        %v880 = vsel %vm866, %v878, %v879
        %v881 = vrot.slane %v264, 5
        %v882 = vrot.slane %v881, 4
        %v883 = vrot.slane %v265, 5
        %v884 = vsel %vm866, %v882, %v883
        %v885 = vrot.slane %v883, 4
        %v886 = vrot.slane %v266, 5
        %v887 = vsel %vm866, %v885, %v886
        %v888 = vrot.slane %v267, 5
        %v889 = vrot.slane %v888, 4
        %v890 = vrot.slane %v268, 5
        %v891 = vsel %vm866, %v889, %v890
        %v892 = vrot.slane %v890, 4
        %v893 = vrot.slane %v269, 5
        %v894 = vsel %vm866, %v892, %v893
        %v895 = vrot.slane %v270, 5
        %v896 = vrot.slane %v895, 4
        %v897 = vrot.slane %v271, 5
        %v898 = vsel %vm866, %v896, %v897
        %v899 = vrot.slane %v897, 4
        %v900 = vrot.slane %v272, 5
        %v901 = vsel %vm866, %v899, %v900
        %v902 = vrot.slane %v273, 5
        %v903 = vrot.slane %v902, 4
        %v904 = vrot.slane %v274, 5
        %v905 = vsel %vm866, %v903, %v904
        %v906 = vrot.slane %v904, 4
        %v907 = vrot.slane %v275, 5
        %v908 = vsel %vm866, %v906, %v907
        %v909 = vrot.slane %v276, 5
        %v910 = vrot.slane %v909, 4
        %v911 = vrot.slane %v277, 5
        %v912 = vsel %vm866, %v910, %v911
        %v913 = vrot.slane %v911, 4
        %v914 = vrot.slane %v278, 5
        %v915 = vsel %vm866, %v913, %v914
        %v916 = vrot.slane %v279, 5
        %v917 = vrot.slane %v916, 4
        %v918 = vrot.slane %v280, 5
        %v919 = vsel %vm866, %v917, %v918
        %v920 = vrot.slane %v918, 4
        %v921 = vrot.slane %v281, 5
        %v922 = vsel %vm866, %v920, %v921
        %s923 = scalar_lea.vmem %s1, 8
        %v924 = vld [vmem:[%s923] sm:$0xf]
        %v925 = vunpack.c.l.b16 %v870
        %v926 = vunpack.c.l.b16 %v873
        %v927 = vunpack.c.l.b16 %v877
        %v928 = vunpack.c.l.b16 %v880
        %v929 = vunpack.c.l.b16 %v884
        %v930 = vunpack.c.l.b16 %v887
        %v931 = vunpack.c.l.b16 %v891
        %v932 = vunpack.c.l.b16 %v894
        %v933 = vunpack.c.l.b16 %v898
        %v934 = vunpack.c.l.b16 %v901
        %v935 = vunpack.c.l.b16 %v905
        %v936 = vunpack.c.l.b16 %v908
        %v937 = vunpack.c.l.b16 %v912
        %v938 = vunpack.c.l.b16 %v915
        %v939 = vunpack.c.l.b16 %v919
        %v940 = vunpack.c.l.b16 %v922
        %v941 = vpack.c.b16 %v926, %v925
        %v942 = vpack.c.b16 %v928, %v927
        %v943 = vpack.c.b16 %v930, %v929
        %v944 = vpack.c.b16 %v932, %v931
        %v945 = vpack.c.b16 %v934, %v933
        %v946 = vpack.c.b16 %v936, %v935
        %v947 = vpack.c.b16 %v938, %v937
        %v948 = vpack.c.b16 %v940, %v939
        %v951 = vunpack.c.l.s4 1983009808
        %v952 = vunpack.c.0.s8 %v951
        %v953 = vlaneseq
        %v954 = vshrl.u32 %v953, 7
        %v955 = vsub.s32 %v952, %v954
        %v956 = vrot.slane %v924, %v955
        %v957 = vcombine.high %v956, %v956
        %v959 = vsel %vm519, %v941, 0
        %v962 = vsel %vm519, %v942, 0
        %v965 = vsel %vm519, %v943, 0
        %v968 = vsel %vm519, %v944, 0
        %v971 = vsel %vm519, %v945, 0
        %v974 = vsel %vm519, %v946, 0
        %v977 = vsel %vm519, %v947, 0
        %v980 = vsel %vm519, %v948, 0
        %v983 = vsel %vm544, %v956, 0
        %v986 = vsel %vm544, %v957, 0
        %988 = vmatprep.subr.bf16.mxu0 %v986
        %989 = vmatpush1.bf16.msra.mxu0 %v983
        %990 = vmatprep.subr.bf16.mxu0 0
        %991 = vmatpush1.bf16.msra.mxu0 0
        %992 = vmatprep.subr.bf16.mxu0 0
        %993 = vmatpush1.bf16.msra.mxu0 0
        %994 = vmatprep.subr.bf16.mxu0 0
        %995 = vmatpush1.bf16.msra.mxu0 0
        %996 = vmatprep.subr.bf16.mxu0 0
        %997 = vmatpush1.bf16.msra.mxu0 0
        %998 = vmatprep.subr.bf16.mxu0 0
        %999 = vmatpush1.bf16.msra.mxu0 0
        %1000 = vmatprep.subr.bf16.mxu0 0
        %1001 = vmatpush1.bf16.msra.mxu0 0
        %1002 = vmatprep.subr.bf16.mxu0 0
        %1003 = vmatpush1.bf16.msra.mxu0 0
        %1004 = vmatprep.subr.bf16.mxu0 0
        %1005 = vmatpush1.bf16.msra.mxu0 0
        %1006 = vmatprep.subr.bf16.mxu0 0
        %1007 = vmatpush1.bf16.msra.mxu0 0
        %1008 = vmatprep.subr.bf16.mxu0 0
        %1009 = vmatpush1.bf16.msra.mxu0 0
        %1010 = vmatprep.subr.bf16.mxu0 0
        %1011 = vmatpush1.bf16.msra.mxu0 0
        %1012 = vmatprep.subr.bf16.mxu0 0
        %1013 = vmatpush1.bf16.msra.mxu0 0
        %1014 = vmatprep.subr.bf16.mxu0 0
        %1015 = vmatpush1.bf16.msra.mxu0 0
        %1016 = vmatprep.subr.bf16.mxu0 0
        %1017 = vmatpush1.bf16.msra.mxu0 0
        %1018 = vmatprep.subr.bf16.mxu0 0
        %1019 = vmatpush1.bf16.msra.mxu0 0
        %1020 = vmatprep.mubr.bf16.mxu0 0
        %1021 = vmatmul.mubr.bf16.gmra.mrb[0].mxu0 %v959
        %v1022 = vpop.f32.mrb[0].mxu0
        %v1023 = vadd.f32 0.0, %v1022
        %v1024 = vpop.f32.mrb[0].mxu0
        %v1025 = vadd.f32 0.0, %v1024
        %v1026 = vpop.f32.mrb[0].mxu0
        %v1027 = vadd.f32 0.0, %v1026
        %v1028 = vpop.f32.mrb[0].mxu0
        %v1029 = vadd.f32 0.0, %v1028
        %1030 = vmatprep.mubr.bf16.mxu0 0
        %1031 = vmatmul.mubr.bf16.gmra.mrb[0].mxu0 %v962
        %v1032 = vpop.f32.mrb[0].mxu0
        %v1033 = vadd.f32 0.0, %v1032
        %v1034 = vpop.f32.mrb[0].mxu0
        %v1035 = vadd.f32 0.0, %v1034
        %v1036 = vpop.f32.mrb[0].mxu0
        %v1037 = vadd.f32 0.0, %v1036
        %v1038 = vpop.f32.mrb[0].mxu0
        %v1039 = vadd.f32 0.0, %v1038
        %1040 = vmatprep.mubr.bf16.mxu0 0
        %1041 = vmatmul.mubr.bf16.gmra.mrb[0].mxu0 %v965
        %v1042 = vpop.f32.mrb[0].mxu0
        %v1043 = vadd.f32 0.0, %v1042
        %v1044 = vpop.f32.mrb[0].mxu0
        %v1045 = vadd.f32 0.0, %v1044
        %v1046 = vpop.f32.mrb[0].mxu0
        %v1047 = vadd.f32 0.0, %v1046
        %v1048 = vpop.f32.mrb[0].mxu0
        %v1049 = vadd.f32 0.0, %v1048
        %1050 = vmatprep.mubr.bf16.mxu0 0
        %1051 = vmatmul.mubr.bf16.gmra.mrb[0].mxu0 %v968
        %v1052 = vpop.f32.mrb[0].mxu0
        %v1053 = vadd.f32 0.0, %v1052
        %v1054 = vpop.f32.mrb[0].mxu0
        %v1055 = vadd.f32 0.0, %v1054
        %v1056 = vpop.f32.mrb[0].mxu0
        %v1057 = vadd.f32 0.0, %v1056
        %v1058 = vpop.f32.mrb[0].mxu0
        %v1059 = vadd.f32 0.0, %v1058
        %1060 = vmatprep.mubr.bf16.mxu0 0
        %1061 = vmatmul.mubr.bf16.gmra.mrb[0].mxu0 %v971
        %v1062 = vpop.f32.mrb[0].mxu0
        %v1063 = vadd.f32 0.0, %v1062
        %v1064 = vpop.f32.mrb[0].mxu0
        %v1065 = vadd.f32 0.0, %v1064
        %v1066 = vpop.f32.mrb[0].mxu0
        %v1067 = vadd.f32 0.0, %v1066
        %v1068 = vpop.f32.mrb[0].mxu0
        %v1069 = vadd.f32 0.0, %v1068
        %1070 = vmatprep.mubr.bf16.mxu0 0
        %1071 = vmatmul.mubr.bf16.gmra.mrb[0].mxu0 %v974
        %v1072 = vpop.f32.mrb[0].mxu0
        %v1073 = vadd.f32 0.0, %v1072
        %v1074 = vpop.f32.mrb[0].mxu0
        %v1075 = vadd.f32 0.0, %v1074
        %v1076 = vpop.f32.mrb[0].mxu0
        %v1077 = vadd.f32 0.0, %v1076
        %v1078 = vpop.f32.mrb[0].mxu0
        %v1079 = vadd.f32 0.0, %v1078
        %1080 = vmatprep.mubr.bf16.mxu0 0
        %1081 = vmatmul.mubr.bf16.gmra.mrb[0].mxu0 %v977
        %v1082 = vpop.f32.mrb[0].mxu0
        %v1083 = vadd.f32 0.0, %v1082
        %v1084 = vpop.f32.mrb[0].mxu0
        %v1085 = vadd.f32 0.0, %v1084
        %v1086 = vpop.f32.mrb[0].mxu0
        %v1087 = vadd.f32 0.0, %v1086
        %v1088 = vpop.f32.mrb[0].mxu0
        %v1089 = vadd.f32 0.0, %v1088
        %1090 = vmatprep.mubr.bf16.mxu0 0
        %1091 = vmatmul.mubr.bf16.gmra.mrb[0].mxu0 %v980
        %v1092 = vpop.f32.mrb[0].mxu0
        %v1093 = vadd.f32 0.0, %v1092
        %v1094 = vpop.f32.mrb[0].mxu0
        %v1095 = vadd.f32 0.0, %v1094
        %v1096 = vpop.f32.mrb[0].mxu0
        %v1097 = vadd.f32 0.0, %v1096
        %v1098 = vpop.f32.mrb[0].mxu0
        %v1099 = vadd.f32 0.0, %v1098
        %1100 = vdwg.mxu0
        %v1101 = vadd.f32 %v778, %v1023
        %v1102 = vadd.f32 %v780, %v1025
        %v1103 = vadd.f32 %v782, %v1027
        %v1104 = vadd.f32 %v784, %v1029
        %v1105 = vadd.f32 %v788, %v1033
        %v1106 = vadd.f32 %v790, %v1035
        %v1107 = vadd.f32 %v792, %v1037
        %v1108 = vadd.f32 %v794, %v1039
        %v1109 = vadd.f32 %v798, %v1043
        %v1110 = vadd.f32 %v800, %v1045
        %v1111 = vadd.f32 %v802, %v1047
        %v1112 = vadd.f32 %v804, %v1049
        %v1113 = vadd.f32 %v808, %v1053
        %v1114 = vadd.f32 %v810, %v1055
        %v1115 = vadd.f32 %v812, %v1057
        %v1116 = vadd.f32 %v814, %v1059
        %v1117 = vadd.f32 %v818, %v1063
        %v1118 = vadd.f32 %v820, %v1065
        %v1119 = vadd.f32 %v822, %v1067
        %v1120 = vadd.f32 %v824, %v1069
        %v1121 = vadd.f32 %v828, %v1073
        %v1122 = vadd.f32 %v830, %v1075
        %v1123 = vadd.f32 %v832, %v1077
        %v1124 = vadd.f32 %v834, %v1079
        %v1125 = vadd.f32 %v838, %v1083
        %v1126 = vadd.f32 %v840, %v1085
        %v1127 = vadd.f32 %v842, %v1087
        %v1128 = vadd.f32 %v844, %v1089
        %v1129 = vadd.f32 %v848, %v1093
        %v1130 = vadd.f32 %v850, %v1095
        %v1131 = vadd.f32 %v852, %v1097
        %v1132 = vadd.f32 %v854, %v1099
        %s1133 = scalar_lea.vmem %s1, 12
        %v1134 = vld [vmem:[%s1133] sm:$0xf]
        %v1137 = vunpack.c.l.b16 %v282
        %v1138 = vunpack.c.l.b16 %v283
        %v1139 = vpack.c.b16 %v1138, %v1137
        %v1142 = vunpack.c.l.s4 1983009808
        %v1143 = vunpack.c.0.s8 %v1142
        %v1144 = vlaneseq
        %v1145 = vshrl.u32 %v1144, 7
        %v1146 = vsub.s32 %v1143, %v1145
        %v1147 = vrot.slane %v1134, %v1146
        %v1148 = vcombine.high %v1147, %v1147
        %v1150 = vsel %vm519, %v1139, 0
        %v1153 = vsel %vm544, %v1147, 0
        %v1156 = vsel %vm544, %v1148, 0
        %1158 = vmatprep.subr.bf16.mxu0 %v1156
        %1159 = vmatpush1.bf16.msra.mxu0 %v1153
        %1160 = vmatprep.subr.bf16.mxu0 0
        %1161 = vmatpush1.bf16.msra.mxu0 0
        %1162 = vmatprep.subr.bf16.mxu0 0
        %1163 = vmatpush1.bf16.msra.mxu0 0
        %1164 = vmatprep.subr.bf16.mxu0 0
        %1165 = vmatpush1.bf16.msra.mxu0 0
        %1166 = vmatprep.subr.bf16.mxu0 0
        %1167 = vmatpush1.bf16.msra.mxu0 0
        %1168 = vmatprep.subr.bf16.mxu0 0
        %1169 = vmatpush1.bf16.msra.mxu0 0
        %1170 = vmatprep.subr.bf16.mxu0 0
        %1171 = vmatpush1.bf16.msra.mxu0 0
        %1172 = vmatprep.subr.bf16.mxu0 0
        %1173 = vmatpush1.bf16.msra.mxu0 0
        %1174 = vmatprep.subr.bf16.mxu0 0
        %1175 = vmatpush1.bf16.msra.mxu0 0
        %1176 = vmatprep.subr.bf16.mxu0 0
        %1177 = vmatpush1.bf16.msra.mxu0 0
        %1178 = vmatprep.subr.bf16.mxu0 0
        %1179 = vmatpush1.bf16.msra.mxu0 0
        %1180 = vmatprep.subr.bf16.mxu0 0
        %1181 = vmatpush1.bf16.msra.mxu0 0
        %1182 = vmatprep.subr.bf16.mxu0 0
        %1183 = vmatpush1.bf16.msra.mxu0 0
        %1184 = vmatprep.subr.bf16.mxu0 0
        %1185 = vmatpush1.bf16.msra.mxu0 0
        %1186 = vmatprep.subr.bf16.mxu0 0
        %1187 = vmatpush1.bf16.msra.mxu0 0
        %1188 = vmatprep.subr.bf16.mxu0 0
        %1189 = vmatpush1.bf16.msra.mxu0 0
        %1190 = vmatprep.mubr.bf16.mxu0 0
        %1191 = vmatmul.mubr.bf16.gmra.mrb[0].mxu0 %v717
        %v1192 = vpop.f32.mrb[0].mxu0
        %v1193 = vadd.f32 0.0, %v1192
        %v1194 = vpop.f32.mrb[0].mxu0
        %v1195 = vadd.f32 0.0, %v1194
        %v1196 = vpop.f32.mrb[0].mxu0
        %v1197 = vadd.f32 0.0, %v1196
        %v1198 = vpop.f32.mrb[0].mxu0
        %v1199 = vadd.f32 0.0, %v1198
        %1200 = vmatprep.mubr.bf16.mxu0 0
        %1201 = vmatmul.mubr.bf16.gmra.mrb[0].mxu0 %v720
        %v1202 = vpop.f32.mrb[0].mxu0
        %v1203 = vadd.f32 0.0, %v1202
        %v1204 = vpop.f32.mrb[0].mxu0
        %v1205 = vadd.f32 0.0, %v1204
        %v1206 = vpop.f32.mrb[0].mxu0
        %v1207 = vadd.f32 0.0, %v1206
        %v1208 = vpop.f32.mrb[0].mxu0
        %v1209 = vadd.f32 0.0, %v1208
        %1210 = vmatprep.mubr.bf16.mxu0 0
        %1211 = vmatmul.mubr.bf16.gmra.mrb[0].mxu0 %v723
        %v1212 = vpop.f32.mrb[0].mxu0
        %v1213 = vadd.f32 0.0, %v1212
        %v1214 = vpop.f32.mrb[0].mxu0
        %v1215 = vadd.f32 0.0, %v1214
        %v1216 = vpop.f32.mrb[0].mxu0
        %v1217 = vadd.f32 0.0, %v1216
        %v1218 = vpop.f32.mrb[0].mxu0
        %v1219 = vadd.f32 0.0, %v1218
        %1220 = vmatprep.mubr.bf16.mxu0 0
        %1221 = vmatmul.mubr.bf16.gmra.mrb[0].mxu0 %v726
        %v1222 = vpop.f32.mrb[0].mxu0
        %v1223 = vadd.f32 0.0, %v1222
        %v1224 = vpop.f32.mrb[0].mxu0
        %v1225 = vadd.f32 0.0, %v1224
        %v1226 = vpop.f32.mrb[0].mxu0
        %v1227 = vadd.f32 0.0, %v1226
        %v1228 = vpop.f32.mrb[0].mxu0
        %v1229 = vadd.f32 0.0, %v1228
        %1230 = vmatprep.mubr.bf16.mxu0 0
        %1231 = vmatmul.mubr.bf16.gmra.mrb[0].mxu0 %v729
        %v1232 = vpop.f32.mrb[0].mxu0
        %v1233 = vadd.f32 0.0, %v1232
        %v1234 = vpop.f32.mrb[0].mxu0
        %v1235 = vadd.f32 0.0, %v1234
        %v1236 = vpop.f32.mrb[0].mxu0
        %v1237 = vadd.f32 0.0, %v1236
        %v1238 = vpop.f32.mrb[0].mxu0
        %v1239 = vadd.f32 0.0, %v1238
        %1240 = vmatprep.mubr.bf16.mxu0 0
        %1241 = vmatmul.mubr.bf16.gmra.mrb[0].mxu0 %v732
        %v1242 = vpop.f32.mrb[0].mxu0
        %v1243 = vadd.f32 0.0, %v1242
        %v1244 = vpop.f32.mrb[0].mxu0
        %v1245 = vadd.f32 0.0, %v1244
        %v1246 = vpop.f32.mrb[0].mxu0
        %v1247 = vadd.f32 0.0, %v1246
        %v1248 = vpop.f32.mrb[0].mxu0
        %v1249 = vadd.f32 0.0, %v1248
        %1250 = vmatprep.mubr.bf16.mxu0 0
        %1251 = vmatmul.mubr.bf16.gmra.mrb[0].mxu0 %v735
        %v1252 = vpop.f32.mrb[0].mxu0
        %v1253 = vadd.f32 0.0, %v1252
        %v1254 = vpop.f32.mrb[0].mxu0
        %v1255 = vadd.f32 0.0, %v1254
        %v1256 = vpop.f32.mrb[0].mxu0
        %v1257 = vadd.f32 0.0, %v1256
        %v1258 = vpop.f32.mrb[0].mxu0
        %v1259 = vadd.f32 0.0, %v1258
        %1260 = vmatprep.mubr.bf16.mxu0 0
        %1261 = vmatmul.mubr.bf16.gmra.mrb[0].mxu0 %v1150
        %v1262 = vpop.f32.mrb[0].mxu0
        %v1263 = vadd.f32 0.0, %v1262
        %v1264 = vpop.f32.mrb[0].mxu0
        %v1265 = vadd.f32 0.0, %v1264
        %v1266 = vpop.f32.mrb[0].mxu0
        %v1267 = vadd.f32 0.0, %v1266
        %v1268 = vpop.f32.mrb[0].mxu0
        %v1269 = vadd.f32 0.0, %v1268
        %1270 = vdwg.mxu0
        %v1271 = vadd.f32 %v1101, %v1193
        %v1272 = vadd.f32 %v1102, %v1195
        %v1273 = vadd.f32 %v1103, %v1197
        %v1274 = vadd.f32 %v1104, %v1199
        %v1275 = vadd.f32 %v1105, %v1203
        %v1276 = vadd.f32 %v1106, %v1205
        %v1277 = vadd.f32 %v1107, %v1207
        %v1278 = vadd.f32 %v1108, %v1209
        %v1279 = vadd.f32 %v1109, %v1213
        %v1280 = vadd.f32 %v1110, %v1215
        %v1281 = vadd.f32 %v1111, %v1217
        %v1282 = vadd.f32 %v1112, %v1219
        %v1283 = vadd.f32 %v1113, %v1223
        %v1284 = vadd.f32 %v1114, %v1225
        %v1285 = vadd.f32 %v1115, %v1227
        %v1286 = vadd.f32 %v1116, %v1229
        %v1287 = vadd.f32 %v1117, %v1233
        %v1288 = vadd.f32 %v1118, %v1235
        %v1289 = vadd.f32 %v1119, %v1237
        %v1290 = vadd.f32 %v1120, %v1239
        %v1291 = vadd.f32 %v1121, %v1243
        %v1292 = vadd.f32 %v1122, %v1245
        %v1293 = vadd.f32 %v1123, %v1247
        %v1294 = vadd.f32 %v1124, %v1249
        %v1295 = vadd.f32 %v1125, %v1253
        %v1296 = vadd.f32 %v1126, %v1255
        %v1297 = vadd.f32 %v1127, %v1257
        %v1298 = vadd.f32 %v1128, %v1259
        %v1299 = vadd.f32 %v1129, %v1263
        %v1300 = vadd.f32 %v1130, %v1265
        %v1301 = vadd.f32 %v1131, %v1267
        %v1302 = vadd.f32 %v1132, %v1269
        %v1304 = vshrl.u32 %v282, 16
        %v1306 = vrot.slane %v1304, 4
        %v1307 = vshll.u32 %v282, 16
        %v1309 = vrot.slane %v1307, 5
        %v1310 = vor.u32 %v1306, %v1309
        %v1311 = vrot.slane %v1310, 4
        %v1313 = vshll.u32 %v283, 16
        %v1315 = vrot.slane %v1313, 5
        %v1316 = vsel %vm291, %v1311, %v1315
        %v1317 = vshrl.u32 %v283, 16
        %v1319 = vrot.slane %v1317, 4
        %v1320 = vor.u32 %v1319, %v1315
        %v1321 = vrot.slane %v1320, 4
        %v1323 = vshll.u32 %v284, 16
        %v1325 = vrot.slane %v1323, 5
        %v1326 = vsel %vm291, %v1321, %v1325
        %s1327 = scalar_lea.vmem %s1, 16
        %v1328 = vld [vmem:[%s1327] sm:$0xf]
        %v1329 = vunpack.c.l.b16 %v1316
        %v1330 = vunpack.c.l.b16 %v1326
        %v1331 = vpack.c.b16 %v1330, %v1329
        %v1334 = vunpack.c.l.s4 1983009808
        %v1335 = vunpack.c.0.s8 %v1334
        %v1336 = vlaneseq
        %v1337 = vshrl.u32 %v1336, 7
        %v1338 = vsub.s32 %v1335, %v1337
        %v1339 = vrot.slane %v1328, %v1338
        %v1340 = vcombine.high %v1339, %v1339
        %v1342 = vsel %vm519, %v1331, 0
        %v1345 = vsel %vm544, %v1339, 0
        %v1348 = vsel %vm544, %v1340, 0
        %1350 = vmatprep.subr.bf16.mxu0 %v1348
        %1351 = vmatpush1.bf16.msra.mxu0 %v1345
        %1352 = vmatprep.subr.bf16.mxu0 0
        %1353 = vmatpush1.bf16.msra.mxu0 0
        %1354 = vmatprep.subr.bf16.mxu0 0
        %1355 = vmatpush1.bf16.msra.mxu0 0
        %1356 = vmatprep.subr.bf16.mxu0 0
        %1357 = vmatpush1.bf16.msra.mxu0 0
        %1358 = vmatprep.subr.bf16.mxu0 0
        %1359 = vmatpush1.bf16.msra.mxu0 0
        %1360 = vmatprep.subr.bf16.mxu0 0
        %1361 = vmatpush1.bf16.msra.mxu0 0
        %1362 = vmatprep.subr.bf16.mxu0 0
        %1363 = vmatpush1.bf16.msra.mxu0 0
        %1364 = vmatprep.subr.bf16.mxu0 0
        %1365 = vmatpush1.bf16.msra.mxu0 0
        %1366 = vmatprep.subr.bf16.mxu0 0
        %1367 = vmatpush1.bf16.msra.mxu0 0
        %1368 = vmatprep.subr.bf16.mxu0 0
        %1369 = vmatpush1.bf16.msra.mxu0 0
        %1370 = vmatprep.subr.bf16.mxu0 0
        %1371 = vmatpush1.bf16.msra.mxu0 0
        %1372 = vmatprep.subr.bf16.mxu0 0
        %1373 = vmatpush1.bf16.msra.mxu0 0
        %1374 = vmatprep.subr.bf16.mxu0 0
        %1375 = vmatpush1.bf16.msra.mxu0 0
        %1376 = vmatprep.subr.bf16.mxu0 0
        %1377 = vmatpush1.bf16.msra.mxu0 0
        %1378 = vmatprep.subr.bf16.mxu0 0
        %1379 = vmatpush1.bf16.msra.mxu0 0
        %1380 = vmatprep.subr.bf16.mxu0 0
        %1381 = vmatpush1.bf16.msra.mxu0 0
        %1382 = vmatprep.mubr.bf16.mxu0 0
        %1383 = vmatmul.mubr.bf16.gmra.mrb[0].mxu0 %v524
        %v1384 = vpop.f32.mrb[0].mxu0
        %v1385 = vadd.f32 0.0, %v1384
        %v1386 = vpop.f32.mrb[0].mxu0
        %v1387 = vadd.f32 0.0, %v1386
        %v1388 = vpop.f32.mrb[0].mxu0
        %v1389 = vadd.f32 0.0, %v1388
        %v1390 = vpop.f32.mrb[0].mxu0
        %v1391 = vadd.f32 0.0, %v1390
        %1392 = vmatprep.mubr.bf16.mxu0 0
        %1393 = vmatmul.mubr.bf16.gmra.mrb[0].mxu0 %v527
        %v1394 = vpop.f32.mrb[0].mxu0
        %v1395 = vadd.f32 0.0, %v1394
        %v1396 = vpop.f32.mrb[0].mxu0
        %v1397 = vadd.f32 0.0, %v1396
        %v1398 = vpop.f32.mrb[0].mxu0
        %v1399 = vadd.f32 0.0, %v1398
        %v1400 = vpop.f32.mrb[0].mxu0
        %v1401 = vadd.f32 0.0, %v1400
        %1402 = vmatprep.mubr.bf16.mxu0 0
        %1403 = vmatmul.mubr.bf16.gmra.mrb[0].mxu0 %v530
        %v1404 = vpop.f32.mrb[0].mxu0
        %v1405 = vadd.f32 0.0, %v1404
        %v1406 = vpop.f32.mrb[0].mxu0
        %v1407 = vadd.f32 0.0, %v1406
        %v1408 = vpop.f32.mrb[0].mxu0
        %v1409 = vadd.f32 0.0, %v1408
        %v1410 = vpop.f32.mrb[0].mxu0
        %v1411 = vadd.f32 0.0, %v1410
        %1412 = vmatprep.mubr.bf16.mxu0 0
        %1413 = vmatmul.mubr.bf16.gmra.mrb[0].mxu0 %v533
        %v1414 = vpop.f32.mrb[0].mxu0
        %v1415 = vadd.f32 0.0, %v1414
        %v1416 = vpop.f32.mrb[0].mxu0
        %v1417 = vadd.f32 0.0, %v1416
        %v1418 = vpop.f32.mrb[0].mxu0
        %v1419 = vadd.f32 0.0, %v1418
        %v1420 = vpop.f32.mrb[0].mxu0
        %v1421 = vadd.f32 0.0, %v1420
        %1422 = vmatprep.mubr.bf16.mxu0 0
        %1423 = vmatmul.mubr.bf16.gmra.mrb[0].mxu0 %v536
        %v1424 = vpop.f32.mrb[0].mxu0
        %v1425 = vadd.f32 0.0, %v1424
        %v1426 = vpop.f32.mrb[0].mxu0
        %v1427 = vadd.f32 0.0, %v1426
        %v1428 = vpop.f32.mrb[0].mxu0
        %v1429 = vadd.f32 0.0, %v1428
        %v1430 = vpop.f32.mrb[0].mxu0
        %v1431 = vadd.f32 0.0, %v1430
        %1432 = vmatprep.mubr.bf16.mxu0 0
        %1433 = vmatmul.mubr.bf16.gmra.mrb[0].mxu0 %v539
        %v1434 = vpop.f32.mrb[0].mxu0
        %v1435 = vadd.f32 0.0, %v1434
        %v1436 = vpop.f32.mrb[0].mxu0
        %v1437 = vadd.f32 0.0, %v1436
        %v1438 = vpop.f32.mrb[0].mxu0
        %v1439 = vadd.f32 0.0, %v1438
        %v1440 = vpop.f32.mrb[0].mxu0
        %v1441 = vadd.f32 0.0, %v1440
        %1442 = vmatprep.mubr.bf16.mxu0 0
        %1443 = vmatmul.mubr.bf16.gmra.mrb[0].mxu0 %v542
        %v1444 = vpop.f32.mrb[0].mxu0
        %v1445 = vadd.f32 0.0, %v1444
        %v1446 = vpop.f32.mrb[0].mxu0
        %v1447 = vadd.f32 0.0, %v1446
        %v1448 = vpop.f32.mrb[0].mxu0
        %v1449 = vadd.f32 0.0, %v1448
        %v1450 = vpop.f32.mrb[0].mxu0
        %v1451 = vadd.f32 0.0, %v1450
        %1452 = vmatprep.mubr.bf16.mxu0 0
        %1453 = vmatmul.mubr.bf16.gmra.mrb[0].mxu0 %v1342
        %v1454 = vpop.f32.mrb[0].mxu0
        %v1455 = vadd.f32 0.0, %v1454
        %v1456 = vpop.f32.mrb[0].mxu0
        %v1457 = vadd.f32 0.0, %v1456
        %v1458 = vpop.f32.mrb[0].mxu0
        %v1459 = vadd.f32 0.0, %v1458
        %v1460 = vpop.f32.mrb[0].mxu0
        %v1461 = vadd.f32 0.0, %v1460
        %1462 = vdwg.mxu0
        %v1463 = vadd.f32 %v1271, %v1385
        %v1464 = vadd.f32 %v1272, %v1387
        %v1465 = vadd.f32 %v1273, %v1389
        %v1466 = vadd.f32 %v1274, %v1391
        %v1467 = vadd.f32 %v1275, %v1395
        %v1468 = vadd.f32 %v1276, %v1397
        %v1469 = vadd.f32 %v1277, %v1399
        %v1470 = vadd.f32 %v1278, %v1401
        %v1471 = vadd.f32 %v1279, %v1405
        %v1472 = vadd.f32 %v1280, %v1407
        %v1473 = vadd.f32 %v1281, %v1409
        %v1474 = vadd.f32 %v1282, %v1411
        %v1475 = vadd.f32 %v1283, %v1415
        %v1476 = vadd.f32 %v1284, %v1417
        %v1477 = vadd.f32 %v1285, %v1419
        %v1478 = vadd.f32 %v1286, %v1421
        %v1479 = vadd.f32 %v1287, %v1425
        %v1480 = vadd.f32 %v1288, %v1427
        %v1481 = vadd.f32 %v1289, %v1429
        %v1482 = vadd.f32 %v1290, %v1431
        %v1483 = vadd.f32 %v1291, %v1435
        %v1484 = vadd.f32 %v1292, %v1437
        %v1485 = vadd.f32 %v1293, %v1439
        %v1486 = vadd.f32 %v1294, %v1441
        %v1487 = vadd.f32 %v1295, %v1445
        %v1488 = vadd.f32 %v1296, %v1447
        %v1489 = vadd.f32 %v1297, %v1449
        %v1490 = vadd.f32 %v1298, %v1451
        %v1491 = vadd.f32 %v1299, %v1455
        %v1492 = vadd.f32 %v1300, %v1457
        %v1493 = vadd.f32 %v1301, %v1459
        %v1494 = vadd.f32 %v1302, %v1461
        %v1496 = vrot.slane %v282, 5
        %v1497 = vrot.slane %v1496, 4
        %v1498 = vrot.slane %v283, 5
        %v1499 = vsel %vm866, %v1497, %v1498
        %v1500 = vrot.slane %v1498, 4
        %v1501 = vrot.slane %v284, 5
        %v1502 = vsel %vm866, %v1500, %v1501
        %s1503 = scalar_lea.vmem %s1, 20
        %v1504 = vld [vmem:[%s1503] sm:$0xf]
        %v1505 = vunpack.c.l.b16 %v1499
        %v1506 = vunpack.c.l.b16 %v1502
        %v1507 = vpack.c.b16 %v1506, %v1505
        %v1510 = vunpack.c.l.s4 1983009808
        %v1511 = vunpack.c.0.s8 %v1510
        %v1512 = vlaneseq
        %v1513 = vshrl.u32 %v1512, 7
        %v1514 = vsub.s32 %v1511, %v1513
        %v1515 = vrot.slane %v1504, %v1514
        %v1516 = vcombine.high %v1515, %v1515
        %v1518 = vsel %vm519, %v1507, 0
        %v1521 = vsel %vm544, %v1515, 0
        %v1524 = vsel %vm544, %v1516, 0
        %1526 = vmatprep.subr.bf16.mxu0 %v1524
        %1527 = vmatpush1.bf16.msra.mxu0 %v1521
        %1528 = vmatprep.subr.bf16.mxu0 0
        %1529 = vmatpush1.bf16.msra.mxu0 0
        %1530 = vmatprep.subr.bf16.mxu0 0
        %1531 = vmatpush1.bf16.msra.mxu0 0
        %1532 = vmatprep.subr.bf16.mxu0 0
        %1533 = vmatpush1.bf16.msra.mxu0 0
        %1534 = vmatprep.subr.bf16.mxu0 0
        %1535 = vmatpush1.bf16.msra.mxu0 0
        %1536 = vmatprep.subr.bf16.mxu0 0
        %1537 = vmatpush1.bf16.msra.mxu0 0
        %1538 = vmatprep.subr.bf16.mxu0 0
        %1539 = vmatpush1.bf16.msra.mxu0 0
        %1540 = vmatprep.subr.bf16.mxu0 0
        %1541 = vmatpush1.bf16.msra.mxu0 0
        %1542 = vmatprep.subr.bf16.mxu0 0
        %1543 = vmatpush1.bf16.msra.mxu0 0
        %1544 = vmatprep.subr.bf16.mxu0 0
        %1545 = vmatpush1.bf16.msra.mxu0 0
        %1546 = vmatprep.subr.bf16.mxu0 0
        %1547 = vmatpush1.bf16.msra.mxu0 0
        %1548 = vmatprep.subr.bf16.mxu0 0
        %1549 = vmatpush1.bf16.msra.mxu0 0
        %1550 = vmatprep.subr.bf16.mxu0 0
        %1551 = vmatpush1.bf16.msra.mxu0 0
        %1552 = vmatprep.subr.bf16.mxu0 0
        %1553 = vmatpush1.bf16.msra.mxu0 0
        %1554 = vmatprep.subr.bf16.mxu0 0
        %1555 = vmatpush1.bf16.msra.mxu0 0
        %1556 = vmatprep.subr.bf16.mxu0 0
        %1557 = vmatpush1.bf16.msra.mxu0 0
        %1558 = vmatprep.mubr.bf16.mxu0 0
        %1559 = vmatmul.mubr.bf16.gmra.mrb[0].mxu0 %v962
        %v1560 = vpop.f32.mrb[0].mxu0
        %v1561 = vadd.f32 0.0, %v1560
        %v1562 = vpop.f32.mrb[0].mxu0
        %v1563 = vadd.f32 0.0, %v1562
        %v1564 = vpop.f32.mrb[0].mxu0
        %v1565 = vadd.f32 0.0, %v1564
        %v1566 = vpop.f32.mrb[0].mxu0
        %v1567 = vadd.f32 0.0, %v1566
        %1568 = vmatprep.mubr.bf16.mxu0 0
        %1569 = vmatmul.mubr.bf16.gmra.mrb[0].mxu0 %v965
        %v1570 = vpop.f32.mrb[0].mxu0
        %v1571 = vadd.f32 0.0, %v1570
        %v1572 = vpop.f32.mrb[0].mxu0
        %v1573 = vadd.f32 0.0, %v1572
        %v1574 = vpop.f32.mrb[0].mxu0
        %v1575 = vadd.f32 0.0, %v1574
        %v1576 = vpop.f32.mrb[0].mxu0
        %v1577 = vadd.f32 0.0, %v1576
        %1578 = vmatprep.mubr.bf16.mxu0 0
        %1579 = vmatmul.mubr.bf16.gmra.mrb[0].mxu0 %v968
        %v1580 = vpop.f32.mrb[0].mxu0
        %v1581 = vadd.f32 0.0, %v1580
        %v1582 = vpop.f32.mrb[0].mxu0
        %v1583 = vadd.f32 0.0, %v1582
        %v1584 = vpop.f32.mrb[0].mxu0
        %v1585 = vadd.f32 0.0, %v1584
        %v1586 = vpop.f32.mrb[0].mxu0
        %v1587 = vadd.f32 0.0, %v1586
        %1588 = vmatprep.mubr.bf16.mxu0 0
        %1589 = vmatmul.mubr.bf16.gmra.mrb[0].mxu0 %v971
        %v1590 = vpop.f32.mrb[0].mxu0
        %v1591 = vadd.f32 0.0, %v1590
        %v1592 = vpop.f32.mrb[0].mxu0
        %v1593 = vadd.f32 0.0, %v1592
        %v1594 = vpop.f32.mrb[0].mxu0
        %v1595 = vadd.f32 0.0, %v1594
        %v1596 = vpop.f32.mrb[0].mxu0
        %v1597 = vadd.f32 0.0, %v1596
        %1598 = vmatprep.mubr.bf16.mxu0 0
        %1599 = vmatmul.mubr.bf16.gmra.mrb[0].mxu0 %v974
        %v1600 = vpop.f32.mrb[0].mxu0
        %v1601 = vadd.f32 0.0, %v1600
        %v1602 = vpop.f32.mrb[0].mxu0
        %v1603 = vadd.f32 0.0, %v1602
        %v1604 = vpop.f32.mrb[0].mxu0
        %v1605 = vadd.f32 0.0, %v1604
        %v1606 = vpop.f32.mrb[0].mxu0
        %v1607 = vadd.f32 0.0, %v1606
        %1608 = vmatprep.mubr.bf16.mxu0 0
        %1609 = vmatmul.mubr.bf16.gmra.mrb[0].mxu0 %v977
        %v1610 = vpop.f32.mrb[0].mxu0
        %v1611 = vadd.f32 0.0, %v1610
        %v1612 = vpop.f32.mrb[0].mxu0
        %v1613 = vadd.f32 0.0, %v1612
        %v1614 = vpop.f32.mrb[0].mxu0
        %v1615 = vadd.f32 0.0, %v1614
        %v1616 = vpop.f32.mrb[0].mxu0
        %v1617 = vadd.f32 0.0, %v1616
        %1618 = vmatprep.mubr.bf16.mxu0 0
        %1619 = vmatmul.mubr.bf16.gmra.mrb[0].mxu0 %v980
        %v1620 = vpop.f32.mrb[0].mxu0
        %v1621 = vadd.f32 0.0, %v1620
        %v1622 = vpop.f32.mrb[0].mxu0
        %v1623 = vadd.f32 0.0, %v1622
        %v1624 = vpop.f32.mrb[0].mxu0
        %v1625 = vadd.f32 0.0, %v1624
        %v1626 = vpop.f32.mrb[0].mxu0
        %v1627 = vadd.f32 0.0, %v1626
        %1628 = vmatprep.mubr.bf16.mxu0 0
        %1629 = vmatmul.mubr.bf16.gmra.mrb[0].mxu0 %v1518
        %v1630 = vpop.f32.mrb[0].mxu0
        %v1631 = vadd.f32 0.0, %v1630
        %v1632 = vpop.f32.mrb[0].mxu0
        %v1633 = vadd.f32 0.0, %v1632
        %v1634 = vpop.f32.mrb[0].mxu0
        %v1635 = vadd.f32 0.0, %v1634
        %v1636 = vpop.f32.mrb[0].mxu0
        %v1637 = vadd.f32 0.0, %v1636
        %1638 = vdwg.mxu0
        %v1639 = vadd.f32 %v1463, %v1561
        %v1640 = vadd.f32 %v1464, %v1563
        %v1641 = vadd.f32 %v1465, %v1565
        %v1642 = vadd.f32 %v1466, %v1567
        %v1643 = vadd.f32 %v1467, %v1571
        %v1644 = vadd.f32 %v1468, %v1573
        %v1645 = vadd.f32 %v1469, %v1575
        %v1646 = vadd.f32 %v1470, %v1577
        %v1647 = vadd.f32 %v1471, %v1581
        %v1648 = vadd.f32 %v1472, %v1583
        %v1649 = vadd.f32 %v1473, %v1585
        %v1650 = vadd.f32 %v1474, %v1587
        %v1651 = vadd.f32 %v1475, %v1591
        %v1652 = vadd.f32 %v1476, %v1593
        %v1653 = vadd.f32 %v1477, %v1595
        %v1654 = vadd.f32 %v1478, %v1597
        %v1655 = vadd.f32 %v1479, %v1601
        %v1656 = vadd.f32 %v1480, %v1603
        %v1657 = vadd.f32 %v1481, %v1605
        %v1658 = vadd.f32 %v1482, %v1607
        %v1659 = vadd.f32 %v1483, %v1611
        %v1660 = vadd.f32 %v1484, %v1613
        %v1661 = vadd.f32 %v1485, %v1615
        %v1662 = vadd.f32 %v1486, %v1617
        %v1663 = vadd.f32 %v1487, %v1621
        %v1664 = vadd.f32 %v1488, %v1623
        %v1665 = vadd.f32 %v1489, %v1625
        %v1666 = vadd.f32 %v1490, %v1627
        %v1667 = vadd.f32 %v1491, %v1631
        %v1668 = vadd.f32 %v1492, %v1633
        %v1669 = vadd.f32 %v1493, %v1635
        %v1670 = vadd.f32 %v1494, %v1637
        %s1671 = scalar_lea.vmem %s1, 24
        %v1672 = vld [vmem:[%s1671] sm:$0xf]
        %v1675 = vunpack.c.l.b16 %v285
        %v1676 = vunpack.c.l.b16 %v286
        %v1677 = vpack.c.b16 %v1676, %v1675
        %v1680 = vunpack.c.l.s4 1983009808
        %v1681 = vunpack.c.0.s8 %v1680
        %v1682 = vlaneseq
        %v1683 = vshrl.u32 %v1682, 7
        %v1684 = vsub.s32 %v1681, %v1683
        %v1685 = vrot.slane %v1672, %v1684
        %v1686 = vcombine.high %v1685, %v1685
        %v1688 = vsel %vm519, %v1677, 0
        %v1691 = vsel %vm544, %v1685, 0
        %v1694 = vsel %vm544, %v1686, 0
        %1696 = vmatprep.subr.bf16.mxu0 %v1694
        %1697 = vmatpush1.bf16.msra.mxu0 %v1691
        %1698 = vmatprep.subr.bf16.mxu0 0
        %1699 = vmatpush1.bf16.msra.mxu0 0
        %1700 = vmatprep.subr.bf16.mxu0 0
        %1701 = vmatpush1.bf16.msra.mxu0 0
        %1702 = vmatprep.subr.bf16.mxu0 0
        %1703 = vmatpush1.bf16.msra.mxu0 0
        %1704 = vmatprep.subr.bf16.mxu0 0
        %1705 = vmatpush1.bf16.msra.mxu0 0
        %1706 = vmatprep.subr.bf16.mxu0 0
        %1707 = vmatpush1.bf16.msra.mxu0 0
        %1708 = vmatprep.subr.bf16.mxu0 0
        %1709 = vmatpush1.bf16.msra.mxu0 0
        %1710 = vmatprep.subr.bf16.mxu0 0
        %1711 = vmatpush1.bf16.msra.mxu0 0
        %1712 = vmatprep.subr.bf16.mxu0 0
        %1713 = vmatpush1.bf16.msra.mxu0 0
        %1714 = vmatprep.subr.bf16.mxu0 0
        %1715 = vmatpush1.bf16.msra.mxu0 0
        %1716 = vmatprep.subr.bf16.mxu0 0
        %1717 = vmatpush1.bf16.msra.mxu0 0
        %1718 = vmatprep.subr.bf16.mxu0 0
        %1719 = vmatpush1.bf16.msra.mxu0 0
        %1720 = vmatprep.subr.bf16.mxu0 0
        %1721 = vmatpush1.bf16.msra.mxu0 0
        %1722 = vmatprep.subr.bf16.mxu0 0
        %1723 = vmatpush1.bf16.msra.mxu0 0
        %1724 = vmatprep.subr.bf16.mxu0 0
        %1725 = vmatpush1.bf16.msra.mxu0 0
        %1726 = vmatprep.subr.bf16.mxu0 0
        %1727 = vmatpush1.bf16.msra.mxu0 0
        %1728 = vmatprep.mubr.bf16.mxu0 0
        %1729 = vmatmul.mubr.bf16.gmra.mrb[0].mxu0 %v720
        %v1730 = vpop.f32.mrb[0].mxu0
        %v1731 = vadd.f32 0.0, %v1730
        %v1732 = vpop.f32.mrb[0].mxu0
        %v1733 = vadd.f32 0.0, %v1732
        %v1734 = vpop.f32.mrb[0].mxu0
        %v1735 = vadd.f32 0.0, %v1734
        %v1736 = vpop.f32.mrb[0].mxu0
        %v1737 = vadd.f32 0.0, %v1736
        %1738 = vmatprep.mubr.bf16.mxu0 0
        %1739 = vmatmul.mubr.bf16.gmra.mrb[0].mxu0 %v723
        %v1740 = vpop.f32.mrb[0].mxu0
        %v1741 = vadd.f32 0.0, %v1740
        %v1742 = vpop.f32.mrb[0].mxu0
        %v1743 = vadd.f32 0.0, %v1742
        %v1744 = vpop.f32.mrb[0].mxu0
        %v1745 = vadd.f32 0.0, %v1744
        %v1746 = vpop.f32.mrb[0].mxu0
        %v1747 = vadd.f32 0.0, %v1746
        %1748 = vmatprep.mubr.bf16.mxu0 0
        %1749 = vmatmul.mubr.bf16.gmra.mrb[0].mxu0 %v726
        %v1750 = vpop.f32.mrb[0].mxu0
        %v1751 = vadd.f32 0.0, %v1750
        %v1752 = vpop.f32.mrb[0].mxu0
        %v1753 = vadd.f32 0.0, %v1752
        %v1754 = vpop.f32.mrb[0].mxu0
        %v1755 = vadd.f32 0.0, %v1754
        %v1756 = vpop.f32.mrb[0].mxu0
        %v1757 = vadd.f32 0.0, %v1756
        %1758 = vmatprep.mubr.bf16.mxu0 0
        %1759 = vmatmul.mubr.bf16.gmra.mrb[0].mxu0 %v729
        %v1760 = vpop.f32.mrb[0].mxu0
        %v1761 = vadd.f32 0.0, %v1760
        %v1762 = vpop.f32.mrb[0].mxu0
        %v1763 = vadd.f32 0.0, %v1762
        %v1764 = vpop.f32.mrb[0].mxu0
        %v1765 = vadd.f32 0.0, %v1764
        %v1766 = vpop.f32.mrb[0].mxu0
        %v1767 = vadd.f32 0.0, %v1766
        %1768 = vmatprep.mubr.bf16.mxu0 0
        %1769 = vmatmul.mubr.bf16.gmra.mrb[0].mxu0 %v732
        %v1770 = vpop.f32.mrb[0].mxu0
        %v1771 = vadd.f32 0.0, %v1770
        %v1772 = vpop.f32.mrb[0].mxu0
        %v1773 = vadd.f32 0.0, %v1772
        %v1774 = vpop.f32.mrb[0].mxu0
        %v1775 = vadd.f32 0.0, %v1774
        %v1776 = vpop.f32.mrb[0].mxu0
        %v1777 = vadd.f32 0.0, %v1776
        %1778 = vmatprep.mubr.bf16.mxu0 0
        %1779 = vmatmul.mubr.bf16.gmra.mrb[0].mxu0 %v735
        %v1780 = vpop.f32.mrb[0].mxu0
        %v1781 = vadd.f32 0.0, %v1780
        %v1782 = vpop.f32.mrb[0].mxu0
        %v1783 = vadd.f32 0.0, %v1782
        %v1784 = vpop.f32.mrb[0].mxu0
        %v1785 = vadd.f32 0.0, %v1784
        %v1786 = vpop.f32.mrb[0].mxu0
        %v1787 = vadd.f32 0.0, %v1786
        %1788 = vmatprep.mubr.bf16.mxu0 0
        %1789 = vmatmul.mubr.bf16.gmra.mrb[0].mxu0 %v1150
        %v1790 = vpop.f32.mrb[0].mxu0
        %v1791 = vadd.f32 0.0, %v1790
        %v1792 = vpop.f32.mrb[0].mxu0
        %v1793 = vadd.f32 0.0, %v1792
        %v1794 = vpop.f32.mrb[0].mxu0
        %v1795 = vadd.f32 0.0, %v1794
        %v1796 = vpop.f32.mrb[0].mxu0
        %v1797 = vadd.f32 0.0, %v1796
        %1798 = vmatprep.mubr.bf16.mxu0 0
        %1799 = vmatmul.mubr.bf16.gmra.mrb[0].mxu0 %v1688
        %v1800 = vpop.f32.mrb[0].mxu0
        %v1801 = vadd.f32 0.0, %v1800
        %v1802 = vpop.f32.mrb[0].mxu0
        %v1803 = vadd.f32 0.0, %v1802
        %v1804 = vpop.f32.mrb[0].mxu0
        %v1805 = vadd.f32 0.0, %v1804
        %v1806 = vpop.f32.mrb[0].mxu0
        %v1807 = vadd.f32 0.0, %v1806
        %1808 = vdwg.mxu0
        %v1809 = vadd.f32 %v1639, %v1731
        %v1810 = vadd.f32 %v1640, %v1733
        %v1811 = vadd.f32 %v1641, %v1735
        %v1812 = vadd.f32 %v1642, %v1737
        %v1813 = vadd.f32 %v1643, %v1741
        %v1814 = vadd.f32 %v1644, %v1743
        %v1815 = vadd.f32 %v1645, %v1745
        %v1816 = vadd.f32 %v1646, %v1747
        %v1817 = vadd.f32 %v1647, %v1751
        %v1818 = vadd.f32 %v1648, %v1753
        %v1819 = vadd.f32 %v1649, %v1755
        %v1820 = vadd.f32 %v1650, %v1757
        %v1821 = vadd.f32 %v1651, %v1761
        %v1822 = vadd.f32 %v1652, %v1763
        %v1823 = vadd.f32 %v1653, %v1765
        %v1824 = vadd.f32 %v1654, %v1767
        %v1825 = vadd.f32 %v1655, %v1771
        %v1826 = vadd.f32 %v1656, %v1773
        %v1827 = vadd.f32 %v1657, %v1775
        %v1828 = vadd.f32 %v1658, %v1777
        %v1829 = vadd.f32 %v1659, %v1781
        %v1830 = vadd.f32 %v1660, %v1783
        %v1831 = vadd.f32 %v1661, %v1785
        %v1832 = vadd.f32 %v1662, %v1787
        %v1833 = vadd.f32 %v1663, %v1791
        %v1834 = vadd.f32 %v1664, %v1793
        %v1835 = vadd.f32 %v1665, %v1795
        %v1836 = vadd.f32 %v1666, %v1797
        %v1837 = vadd.f32 %v1667, %v1801
        %v1838 = vadd.f32 %v1668, %v1803
        %v1839 = vadd.f32 %v1669, %v1805
        %v1840 = vadd.f32 %v1670, %v1807
        %v1842 = vshrl.u32 %v285, 16
        %v1844 = vrot.slane %v1842, 4
        %v1845 = vshll.u32 %v285, 16
        %v1847 = vrot.slane %v1845, 5
        %v1848 = vor.u32 %v1844, %v1847
        %v1849 = vrot.slane %v1848, 4
        %v1851 = vshll.u32 %v286, 16
        %v1853 = vrot.slane %v1851, 5
        %v1854 = vsel %vm291, %v1849, %v1853
        %v1855 = vshrl.u32 %v286, 16
        %v1857 = vrot.slane %v1855, 4
        %v1858 = vor.u32 %v1857, %v1853
        %v1859 = vrot.slane %v1858, 4
        %v1861 = vshll.u32 %v287, 16
        %v1863 = vrot.slane %v1861, 5
        %v1864 = vsel %vm291, %v1859, %v1863
        %s1865 = scalar_lea.vmem %s1, 28
        %v1866 = vld [vmem:[%s1865] sm:$0xf]
        %v1867 = vunpack.c.l.b16 %v1854
        %v1868 = vunpack.c.l.b16 %v1864
        %v1869 = vpack.c.b16 %v1868, %v1867
        %v1872 = vunpack.c.l.s4 1983009808
        %v1873 = vunpack.c.0.s8 %v1872
        %v1874 = vlaneseq
        %v1875 = vshrl.u32 %v1874, 7
        %v1876 = vsub.s32 %v1873, %v1875
        %v1877 = vrot.slane %v1866, %v1876
        %v1878 = vcombine.high %v1877, %v1877
        %v1880 = vsel %vm519, %v1869, 0
        %v1883 = vsel %vm544, %v1877, 0
        %v1886 = vsel %vm544, %v1878, 0
        %1888 = vmatprep.subr.bf16.mxu0 %v1886
        %1889 = vmatpush1.bf16.msra.mxu0 %v1883
        %1890 = vmatprep.subr.bf16.mxu0 0
        %1891 = vmatpush1.bf16.msra.mxu0 0
        %1892 = vmatprep.subr.bf16.mxu0 0
        %1893 = vmatpush1.bf16.msra.mxu0 0
        %1894 = vmatprep.subr.bf16.mxu0 0
        %1895 = vmatpush1.bf16.msra.mxu0 0
        %1896 = vmatprep.subr.bf16.mxu0 0
        %1897 = vmatpush1.bf16.msra.mxu0 0
        %1898 = vmatprep.subr.bf16.mxu0 0
        %1899 = vmatpush1.bf16.msra.mxu0 0
        %1900 = vmatprep.subr.bf16.mxu0 0
        %1901 = vmatpush1.bf16.msra.mxu0 0
        %1902 = vmatprep.subr.bf16.mxu0 0
        %1903 = vmatpush1.bf16.msra.mxu0 0
        %1904 = vmatprep.subr.bf16.mxu0 0
        %1905 = vmatpush1.bf16.msra.mxu0 0
        %1906 = vmatprep.subr.bf16.mxu0 0
        %1907 = vmatpush1.bf16.msra.mxu0 0
        %1908 = vmatprep.subr.bf16.mxu0 0
        %1909 = vmatpush1.bf16.msra.mxu0 0
        %1910 = vmatprep.subr.bf16.mxu0 0
        %1911 = vmatpush1.bf16.msra.mxu0 0
        %1912 = vmatprep.subr.bf16.mxu0 0
        %1913 = vmatpush1.bf16.msra.mxu0 0
        %1914 = vmatprep.subr.bf16.mxu0 0
        %1915 = vmatpush1.bf16.msra.mxu0 0
        %1916 = vmatprep.subr.bf16.mxu0 0
        %1917 = vmatpush1.bf16.msra.mxu0 0
        %1918 = vmatprep.subr.bf16.mxu0 0
        %1919 = vmatpush1.bf16.msra.mxu0 0
        %1920 = vmatprep.mubr.bf16.mxu0 0
        %1921 = vmatmul.mubr.bf16.gmra.mrb[0].mxu0 %v527
        %v1922 = vpop.f32.mrb[0].mxu0
        %v1923 = vadd.f32 0.0, %v1922
        %v1924 = vpop.f32.mrb[0].mxu0
        %v1925 = vadd.f32 0.0, %v1924
        %v1926 = vpop.f32.mrb[0].mxu0
        %v1927 = vadd.f32 0.0, %v1926
        %v1928 = vpop.f32.mrb[0].mxu0
        %v1929 = vadd.f32 0.0, %v1928
        %1930 = vmatprep.mubr.bf16.mxu0 0
        %1931 = vmatmul.mubr.bf16.gmra.mrb[0].mxu0 %v530
        %v1932 = vpop.f32.mrb[0].mxu0
        %v1933 = vadd.f32 0.0, %v1932
        %v1934 = vpop.f32.mrb[0].mxu0
        %v1935 = vadd.f32 0.0, %v1934
        %v1936 = vpop.f32.mrb[0].mxu0
        %v1937 = vadd.f32 0.0, %v1936
        %v1938 = vpop.f32.mrb[0].mxu0
        %v1939 = vadd.f32 0.0, %v1938
        %1940 = vmatprep.mubr.bf16.mxu0 0
        %1941 = vmatmul.mubr.bf16.gmra.mrb[0].mxu0 %v533
        %v1942 = vpop.f32.mrb[0].mxu0
        %v1943 = vadd.f32 0.0, %v1942
        %v1944 = vpop.f32.mrb[0].mxu0
        %v1945 = vadd.f32 0.0, %v1944
        %v1946 = vpop.f32.mrb[0].mxu0
        %v1947 = vadd.f32 0.0, %v1946
        %v1948 = vpop.f32.mrb[0].mxu0
        %v1949 = vadd.f32 0.0, %v1948
        %1950 = vmatprep.mubr.bf16.mxu0 0
        %1951 = vmatmul.mubr.bf16.gmra.mrb[0].mxu0 %v536
        %v1952 = vpop.f32.mrb[0].mxu0
        %v1953 = vadd.f32 0.0, %v1952
        %v1954 = vpop.f32.mrb[0].mxu0
        %v1955 = vadd.f32 0.0, %v1954
        %v1956 = vpop.f32.mrb[0].mxu0
        %v1957 = vadd.f32 0.0, %v1956
        %v1958 = vpop.f32.mrb[0].mxu0
        %v1959 = vadd.f32 0.0, %v1958
        %1960 = vmatprep.mubr.bf16.mxu0 0
        %1961 = vmatmul.mubr.bf16.gmra.mrb[0].mxu0 %v539
        %v1962 = vpop.f32.mrb[0].mxu0
        %v1963 = vadd.f32 0.0, %v1962
        %v1964 = vpop.f32.mrb[0].mxu0
        %v1965 = vadd.f32 0.0, %v1964
        %v1966 = vpop.f32.mrb[0].mxu0
        %v1967 = vadd.f32 0.0, %v1966
        %v1968 = vpop.f32.mrb[0].mxu0
        %v1969 = vadd.f32 0.0, %v1968
        %1970 = vmatprep.mubr.bf16.mxu0 0
        %1971 = vmatmul.mubr.bf16.gmra.mrb[0].mxu0 %v542
        %v1972 = vpop.f32.mrb[0].mxu0
        %v1973 = vadd.f32 0.0, %v1972
        %v1974 = vpop.f32.mrb[0].mxu0
        %v1975 = vadd.f32 0.0, %v1974
        %v1976 = vpop.f32.mrb[0].mxu0
        %v1977 = vadd.f32 0.0, %v1976
        %v1978 = vpop.f32.mrb[0].mxu0
        %v1979 = vadd.f32 0.0, %v1978
        %1980 = vmatprep.mubr.bf16.mxu0 0
        %1981 = vmatmul.mubr.bf16.gmra.mrb[0].mxu0 %v1342
        %v1982 = vpop.f32.mrb[0].mxu0
        %v1983 = vadd.f32 0.0, %v1982
        %v1984 = vpop.f32.mrb[0].mxu0
        %v1985 = vadd.f32 0.0, %v1984
        %v1986 = vpop.f32.mrb[0].mxu0
        %v1987 = vadd.f32 0.0, %v1986
        %v1988 = vpop.f32.mrb[0].mxu0
        %v1989 = vadd.f32 0.0, %v1988
        %1990 = vmatprep.mubr.bf16.mxu0 0
        %1991 = vmatmul.mubr.bf16.gmra.mrb[0].mxu0 %v1880
        %v1992 = vpop.f32.mrb[0].mxu0
        %v1993 = vadd.f32 0.0, %v1992
        %v1994 = vpop.f32.mrb[0].mxu0
        %v1995 = vadd.f32 0.0, %v1994
        %v1996 = vpop.f32.mrb[0].mxu0
        %v1997 = vadd.f32 0.0, %v1996
        %v1998 = vpop.f32.mrb[0].mxu0
        %v1999 = vadd.f32 0.0, %v1998
        %2000 = vdwg.mxu0
        %v2001 = vadd.f32 %v1809, %v1923
        %v2002 = vadd.f32 %v1810, %v1925
        %v2003 = vadd.f32 %v1811, %v1927
        %v2004 = vadd.f32 %v1812, %v1929
        %v2005 = vadd.f32 %v1813, %v1933
        %v2006 = vadd.f32 %v1814, %v1935
        %v2007 = vadd.f32 %v1815, %v1937
        %v2008 = vadd.f32 %v1816, %v1939
        %v2009 = vadd.f32 %v1817, %v1943
        %v2010 = vadd.f32 %v1818, %v1945
        %v2011 = vadd.f32 %v1819, %v1947
        %v2012 = vadd.f32 %v1820, %v1949
        %v2013 = vadd.f32 %v1821, %v1953
        %v2014 = vadd.f32 %v1822, %v1955
        %v2015 = vadd.f32 %v1823, %v1957
        %v2016 = vadd.f32 %v1824, %v1959
        %v2017 = vadd.f32 %v1825, %v1963
        %v2018 = vadd.f32 %v1826, %v1965
        %v2019 = vadd.f32 %v1827, %v1967
        %v2020 = vadd.f32 %v1828, %v1969
        %v2021 = vadd.f32 %v1829, %v1973
        %v2022 = vadd.f32 %v1830, %v1975
        %v2023 = vadd.f32 %v1831, %v1977
        %v2024 = vadd.f32 %v1832, %v1979
        %v2025 = vadd.f32 %v1833, %v1983
        %v2026 = vadd.f32 %v1834, %v1985
        %v2027 = vadd.f32 %v1835, %v1987
        %v2028 = vadd.f32 %v1836, %v1989
        %v2029 = vadd.f32 %v1837, %v1993
        %v2030 = vadd.f32 %v1838, %v1995
        %v2031 = vadd.f32 %v1839, %v1997
        %v2032 = vadd.f32 %v1840, %v1999
        %v2034 = vrot.slane %v285, 5
        %v2035 = vrot.slane %v2034, 4
        %v2036 = vrot.slane %v286, 5
        %v2037 = vsel %vm866, %v2035, %v2036
        %v2038 = vrot.slane %v2036, 4
        %v2039 = vrot.slane %v287, 5
        %v2040 = vsel %vm866, %v2038, %v2039
        %s2041 = scalar_lea.vmem %s1, 32
        %v2042 = vld [vmem:[%s2041] sm:$0xf]
        %v2043 = vunpack.c.l.b16 %v2037
        %v2044 = vunpack.c.l.b16 %v2040
        %v2045 = vpack.c.b16 %v2044, %v2043
        %v2048 = vunpack.c.l.s4 1983009808
        %v2049 = vunpack.c.0.s8 %v2048
        %v2050 = vlaneseq
        %v2051 = vshrl.u32 %v2050, 7
        %v2052 = vsub.s32 %v2049, %v2051
        %v2053 = vrot.slane %v2042, %v2052
        %v2054 = vcombine.high %v2053, %v2053
        %v2056 = vsel %vm519, %v2045, 0
        %v2059 = vsel %vm544, %v2053, 0
        %v2062 = vsel %vm544, %v2054, 0
        %2064 = vmatprep.subr.bf16.mxu0 %v2062
        %2065 = vmatpush1.bf16.msra.mxu0 %v2059
        %2066 = vmatprep.subr.bf16.mxu0 0
        %2067 = vmatpush1.bf16.msra.mxu0 0
        %2068 = vmatprep.subr.bf16.mxu0 0
        %2069 = vmatpush1.bf16.msra.mxu0 0
        %2070 = vmatprep.subr.bf16.mxu0 0
        %2071 = vmatpush1.bf16.msra.mxu0 0
        %2072 = vmatprep.subr.bf16.mxu0 0
        %2073 = vmatpush1.bf16.msra.mxu0 0
        %2074 = vmatprep.subr.bf16.mxu0 0
        %2075 = vmatpush1.bf16.msra.mxu0 0
        %2076 = vmatprep.subr.bf16.mxu0 0
        %2077 = vmatpush1.bf16.msra.mxu0 0
        %2078 = vmatprep.subr.bf16.mxu0 0
        %2079 = vmatpush1.bf16.msra.mxu0 0
        %2080 = vmatprep.subr.bf16.mxu0 0
        %2081 = vmatpush1.bf16.msra.mxu0 0
        %2082 = vmatprep.subr.bf16.mxu0 0
        %2083 = vmatpush1.bf16.msra.mxu0 0
        %2084 = vmatprep.subr.bf16.mxu0 0
        %2085 = vmatpush1.bf16.msra.mxu0 0
        %2086 = vmatprep.subr.bf16.mxu0 0
        %2087 = vmatpush1.bf16.msra.mxu0 0
        %2088 = vmatprep.subr.bf16.mxu0 0
        %2089 = vmatpush1.bf16.msra.mxu0 0
        %2090 = vmatprep.subr.bf16.mxu0 0
        %2091 = vmatpush1.bf16.msra.mxu0 0
        %2092 = vmatprep.subr.bf16.mxu0 0
        %2093 = vmatpush1.bf16.msra.mxu0 0
        %2094 = vmatprep.subr.bf16.mxu0 0
        %2095 = vmatpush1.bf16.msra.mxu0 0
        %2096 = vmatprep.mubr.bf16.mxu0 0
        %2097 = vmatmul.mubr.bf16.gmra.mrb[0].mxu0 %v965
        %v2098 = vpop.f32.mrb[0].mxu0
        %v2099 = vadd.f32 0.0, %v2098
        %v2100 = vpop.f32.mrb[0].mxu0
        %v2101 = vadd.f32 0.0, %v2100
        %v2102 = vpop.f32.mrb[0].mxu0
        %v2103 = vadd.f32 0.0, %v2102
        %v2104 = vpop.f32.mrb[0].mxu0
        %v2105 = vadd.f32 0.0, %v2104
        %2106 = vmatprep.mubr.bf16.mxu0 0
        %2107 = vmatmul.mubr.bf16.gmra.mrb[0].mxu0 %v968
        %v2108 = vpop.f32.mrb[0].mxu0
        %v2109 = vadd.f32 0.0, %v2108
        %v2110 = vpop.f32.mrb[0].mxu0
        %v2111 = vadd.f32 0.0, %v2110
        %v2112 = vpop.f32.mrb[0].mxu0
        %v2113 = vadd.f32 0.0, %v2112
        %v2114 = vpop.f32.mrb[0].mxu0
        %v2115 = vadd.f32 0.0, %v2114
        %2116 = vmatprep.mubr.bf16.mxu0 0
        %2117 = vmatmul.mubr.bf16.gmra.mrb[0].mxu0 %v971
        %v2118 = vpop.f32.mrb[0].mxu0
        %v2119 = vadd.f32 0.0, %v2118
        %v2120 = vpop.f32.mrb[0].mxu0
        %v2121 = vadd.f32 0.0, %v2120
        %v2122 = vpop.f32.mrb[0].mxu0
        %v2123 = vadd.f32 0.0, %v2122
        %v2124 = vpop.f32.mrb[0].mxu0
        %v2125 = vadd.f32 0.0, %v2124
        %2126 = vmatprep.mubr.bf16.mxu0 0
        %2127 = vmatmul.mubr.bf16.gmra.mrb[0].mxu0 %v974
        %v2128 = vpop.f32.mrb[0].mxu0
        %v2129 = vadd.f32 0.0, %v2128
        %v2130 = vpop.f32.mrb[0].mxu0
        %v2131 = vadd.f32 0.0, %v2130
        %v2132 = vpop.f32.mrb[0].mxu0
        %v2133 = vadd.f32 0.0, %v2132
        %v2134 = vpop.f32.mrb[0].mxu0
        %v2135 = vadd.f32 0.0, %v2134
        %2136 = vmatprep.mubr.bf16.mxu0 0
        %2137 = vmatmul.mubr.bf16.gmra.mrb[0].mxu0 %v977
        %v2138 = vpop.f32.mrb[0].mxu0
        %v2139 = vadd.f32 0.0, %v2138
        %v2140 = vpop.f32.mrb[0].mxu0
        %v2141 = vadd.f32 0.0, %v2140
        %v2142 = vpop.f32.mrb[0].mxu0
        %v2143 = vadd.f32 0.0, %v2142
        %v2144 = vpop.f32.mrb[0].mxu0
        %v2145 = vadd.f32 0.0, %v2144
        %2146 = vmatprep.mubr.bf16.mxu0 0
        %2147 = vmatmul.mubr.bf16.gmra.mrb[0].mxu0 %v980
        %v2148 = vpop.f32.mrb[0].mxu0
        %v2149 = vadd.f32 0.0, %v2148
        %v2150 = vpop.f32.mrb[0].mxu0
        %v2151 = vadd.f32 0.0, %v2150
        %v2152 = vpop.f32.mrb[0].mxu0
        %v2153 = vadd.f32 0.0, %v2152
        %v2154 = vpop.f32.mrb[0].mxu0
        %v2155 = vadd.f32 0.0, %v2154
        %2156 = vmatprep.mubr.bf16.mxu0 0
        %2157 = vmatmul.mubr.bf16.gmra.mrb[0].mxu0 %v1518
        %v2158 = vpop.f32.mrb[0].mxu0
        %v2159 = vadd.f32 0.0, %v2158
        %v2160 = vpop.f32.mrb[0].mxu0
        %v2161 = vadd.f32 0.0, %v2160
        %v2162 = vpop.f32.mrb[0].mxu0
        %v2163 = vadd.f32 0.0, %v2162
        %v2164 = vpop.f32.mrb[0].mxu0
        %v2165 = vadd.f32 0.0, %v2164
        %2166 = vmatprep.mubr.bf16.mxu0 0
        %2167 = vmatmul.mubr.bf16.gmra.mrb[0].mxu0 %v2056
        %v2168 = vpop.f32.mrb[0].mxu0
        %v2169 = vadd.f32 0.0, %v2168
        %v2170 = vpop.f32.mrb[0].mxu0
        %v2171 = vadd.f32 0.0, %v2170
        %v2172 = vpop.f32.mrb[0].mxu0
        %v2173 = vadd.f32 0.0, %v2172
        %v2174 = vpop.f32.mrb[0].mxu0
        %v2175 = vadd.f32 0.0, %v2174
        %2176 = vdwg.mxu0
        %v2177 = vadd.f32 %v2001, %v2099
        %v2178 = vadd.f32 %v2002, %v2101
        %v2179 = vadd.f32 %v2003, %v2103
        %v2180 = vadd.f32 %v2004, %v2105
        %v2181 = vadd.f32 %v2005, %v2109
        %v2182 = vadd.f32 %v2006, %v2111
        %v2183 = vadd.f32 %v2007, %v2113
        %v2184 = vadd.f32 %v2008, %v2115
        %v2185 = vadd.f32 %v2009, %v2119
        %v2186 = vadd.f32 %v2010, %v2121
        %v2187 = vadd.f32 %v2011, %v2123
        %v2188 = vadd.f32 %v2012, %v2125
        %v2189 = vadd.f32 %v2013, %v2129
        %v2190 = vadd.f32 %v2014, %v2131
        %v2191 = vadd.f32 %v2015, %v2133
        %v2192 = vadd.f32 %v2016, %v2135
        %v2193 = vadd.f32 %v2017, %v2139
        %v2194 = vadd.f32 %v2018, %v2141
        %v2195 = vadd.f32 %v2019, %v2143
        %v2196 = vadd.f32 %v2020, %v2145
        %v2197 = vadd.f32 %v2021, %v2149
        %v2198 = vadd.f32 %v2022, %v2151
        %v2199 = vadd.f32 %v2023, %v2153
        %v2200 = vadd.f32 %v2024, %v2155
        %v2201 = vadd.f32 %v2025, %v2159
        %v2202 = vadd.f32 %v2026, %v2161
        %v2203 = vadd.f32 %v2027, %v2163
        %v2204 = vadd.f32 %v2028, %v2165
        %v2205 = vadd.f32 %v2029, %v2169
        %v2206 = vadd.f32 %v2030, %v2171
        %v2207 = vadd.f32 %v2031, %v2173
        %v2208 = vadd.f32 %v2032, %v2175
        %v2209 = vld [vmem:[%s2] sm:$0x3]
        %v2211 = vlaneseq
        %v2212 = vshrl.u32 %v2211, 7
        %v2213 = vsub.s32 0, %v2212
        %v2214 = vrot.slane %v2209, %v2213
        %v2215 = vlaneseq
        %v2216 = vshrl.u32 %v2215, 7
        %v2217 = vsub.s32 1, %v2216
        %v2218 = vrot.slane %v2209, %v2217
        %v2221 = vadd.f32 %v2177, %v2214
        %v2222 = vadd.f32 %v2178, %v2218
        %v2223 = vadd.f32 %v2179, %v2214
        %v2224 = vadd.f32 %v2180, %v2218
        %v2225 = vadd.f32 %v2181, %v2214
        %v2226 = vadd.f32 %v2182, %v2218
        %v2227 = vadd.f32 %v2183, %v2214
        %v2228 = vadd.f32 %v2184, %v2218
        %v2229 = vadd.f32 %v2185, %v2214
        %v2230 = vadd.f32 %v2186, %v2218
        %v2231 = vadd.f32 %v2187, %v2214
        %v2232 = vadd.f32 %v2188, %v2218
        %v2233 = vadd.f32 %v2189, %v2214
        %v2234 = vadd.f32 %v2190, %v2218
        %v2235 = vadd.f32 %v2191, %v2214
        %v2236 = vadd.f32 %v2192, %v2218
        %v2237 = vadd.f32 %v2193, %v2214
        %v2238 = vadd.f32 %v2194, %v2218
        %v2239 = vadd.f32 %v2195, %v2214
        %v2240 = vadd.f32 %v2196, %v2218
        %v2241 = vadd.f32 %v2197, %v2214
        %v2242 = vadd.f32 %v2198, %v2218
        %v2243 = vadd.f32 %v2199, %v2214
        %v2244 = vadd.f32 %v2200, %v2218
        %v2245 = vadd.f32 %v2201, %v2214
        %v2246 = vadd.f32 %v2202, %v2218
        %v2247 = vadd.f32 %v2203, %v2214
        %v2248 = vadd.f32 %v2204, %v2218
        %v2249 = vadd.f32 %v2205, %v2214
        %v2250 = vadd.f32 %v2206, %v2218
        %v2251 = vadd.f32 %v2207, %v2214
        %v2252 = vadd.f32 %v2208, %v2218
        %v2253 = vmax.f32 %v2221, 0.0
        %v2254 = vmax.f32 %v2222, 0.0
        %v2255 = vmax.f32 %v2223, 0.0
        %v2256 = vmax.f32 %v2224, 0.0
        %v2257 = vmax.f32 %v2225, 0.0
        %v2258 = vmax.f32 %v2226, 0.0
        %v2259 = vmax.f32 %v2227, 0.0
        %v2260 = vmax.f32 %v2228, 0.0
        %v2261 = vmax.f32 %v2229, 0.0
        %v2262 = vmax.f32 %v2230, 0.0
        %v2263 = vmax.f32 %v2231, 0.0
        %v2264 = vmax.f32 %v2232, 0.0
        %v2265 = vmax.f32 %v2233, 0.0
        %v2266 = vmax.f32 %v2234, 0.0
        %v2267 = vmax.f32 %v2235, 0.0
        %v2268 = vmax.f32 %v2236, 0.0
        %v2269 = vmax.f32 %v2237, 0.0
        %v2270 = vmax.f32 %v2238, 0.0
        %v2271 = vmax.f32 %v2239, 0.0
        %v2272 = vmax.f32 %v2240, 0.0
        %v2273 = vmax.f32 %v2241, 0.0
        %v2274 = vmax.f32 %v2242, 0.0
        %v2275 = vmax.f32 %v2243, 0.0
        %v2276 = vmax.f32 %v2244, 0.0
        %v2277 = vmax.f32 %v2245, 0.0
        %v2278 = vmax.f32 %v2246, 0.0
        %v2279 = vmax.f32 %v2247, 0.0
        %v2280 = vmax.f32 %v2248, 0.0
        %v2281 = vmax.f32 %v2249, 0.0
        %v2282 = vmax.f32 %v2250, 0.0
        %v2283 = vmax.f32 %v2251, 0.0
        %v2284 = vmax.f32 %v2252, 0.0
        %v2285 = vld [vmem:[#allocation2] sm:$0x3]
        %v2286 = vadd.f32 %v2253, %v2255
        %v2287 = vadd.f32 %v2286, %v2257
        %v2288 = vadd.f32 %v2287, %v2259
        %v2289 = vadd.f32 %v2288, %v2261
        %v2290 = vadd.f32 %v2289, %v2263
        %v2291 = vadd.f32 %v2290, %v2265
        %v2292 = vadd.f32 %v2291, %v2267
        %v2293 = vadd.f32 %v2292, %v2269
        %v2294 = vadd.f32 %v2293, %v2271
        %v2295 = vadd.f32 %v2294, %v2273
        %v2296 = vadd.f32 %v2295, %v2275
        %v2297 = vadd.f32 %v2296, %v2277
        %v2298 = vadd.f32 %v2297, %v2279
        %v2299 = vadd.f32 %v2298, %v2281
        %v2300 = vadd.f32 %v2299, %v2283
        %v2301 = vrot.slane %v2300, 4
        %v2302 = vadd.f32 %v2300, %v2301
        %v2303 = vrot.slane %v2302, 2
        %v2304 = vadd.f32 %v2302, %v2303
        %v2305 = vrot.slane %v2304, 1
        %v2306 = vadd.f32 %v2304, %v2305
        %v2307 = vadd.f32 %v2254, %v2256
        %v2308 = vadd.f32 %v2307, %v2258
        %v2309 = vadd.f32 %v2308, %v2260
        %v2310 = vadd.f32 %v2309, %v2262
        %v2311 = vadd.f32 %v2310, %v2264
        %v2312 = vadd.f32 %v2311, %v2266
        %v2313 = vadd.f32 %v2312, %v2268
        %v2314 = vadd.f32 %v2313, %v2270
        %v2315 = vadd.f32 %v2314, %v2272
        %v2316 = vadd.f32 %v2315, %v2274
        %v2317 = vadd.f32 %v2316, %v2276
        %v2318 = vadd.f32 %v2317, %v2278
        %v2319 = vadd.f32 %v2318, %v2280
        %v2320 = vadd.f32 %v2319, %v2282
        %v2321 = vadd.f32 %v2320, %v2284
        %v2322 = vrot.slane %v2321, 4
        %v2323 = vadd.f32 %v2321, %v2322
        %v2324 = vrot.slane %v2323, 2
        %v2325 = vadd.f32 %v2323, %v2324
        %v2326 = vrot.slane %v2325, 1
        %v2327 = vadd.f32 %v2325, %v2326
        %v2330 = vcombine.low %v2306, %v2327
        %v2332 = vunpack.c.l.s4 1966171168
        %v2333 = vunpack.c.0.s8 %v2332
        %v2334 = vlaneseq
        %v2335 = vshrl.u32 %v2334, 7
        %v2336 = vsub.s32 %v2333, %v2335
        %v2337 = vrot.slane %v2330, %v2336
        %v2339 = vunpack.c.l.s4 1966171168
        %v2340 = vunpack.c.0.s8 %v2339
        %v2341 = vlaneseq
        %v2342 = vshrl.u32 %v2341, 7
        %v2343 = vsub.s32 %v2340, %v2342
        %v2344 = vrot.slane %v2337, %v2343
        %v2346 = vadd.f32 %v2285, %v2344
        %v2347 = vlaneseq
        %vm2348 = vcmp.ge.s32.totalorder %v2347, 0
        %vm2349 = vcmp.lt.s32.totalorder %v2347, 256
        %vm2350 = vmand %vm2348, %vm2349
        %2351 = vst.msk [vmem:[#allocation2] sm:$0x3] %vm2350, %v2346
        %p2352 = scmp.eq.s32.totalorder %s24, 1
        // Predicated region
        $region45: #{tpu_custom_call.1} parent=39 // pred_check
          %p2353 = pneg %p2352
        $region46: #{tpu_custom_call.1} parent=39 // pred_check_branch
          %2355 = sbr.rel (%p2353) target = $region48
        $region47: #{tpu_custom_call.1} parent=39 // pred_region
          %v2356 = vld [vmem:[#allocation2] sm:$0x3]
          %v2357 = vmul.f32 %v2356, 0.00390625
          %v2358 = vld [vmem:[%s3] sm:$0xff]
          %v2359 = vld [vmem:[%s3 + $0x8] sm:$0xff]
          %v2360 = vld [vmem:[%s3 + $0x10] sm:$0xff]
          %v2361 = vld [vmem:[%s3 + $0x18] sm:$0xff]
          %v2362 = vld [vmem:[%s3 + $0x20] sm:$0xff]
          %v2363 = vld [vmem:[%s3 + $0x28] sm:$0xff]
          %v2364 = vld [vmem:[%s3 + $0x30] sm:$0xff]
          %v2365 = vld [vmem:[%s3 + $0x38] sm:$0xff]
          %v2366 = vld [vmem:[%s3 + $0x40] sm:$0xff]
          %v2367 = vld [vmem:[%s3 + $0x48] sm:$0xff]
          %v2368 = vld [vmem:[%s3 + $0x50] sm:$0xff]
          %v2369 = vld [vmem:[%s3 + $0x58] sm:$0xff]
          %v2370 = vld [vmem:[%s3 + $0x60] sm:$0xff]
          %v2371 = vld [vmem:[%s3 + $0x68] sm:$0xff]
          %v2372 = vld [vmem:[%s3 + $0x70] sm:$0xff]
          %v2373 = vld [vmem:[%s3 + $0x78] sm:$0xff]
          %v2374 = vld [vmem:[%s3 + $0x80] sm:$0xff]
          %v2375 = vld [vmem:[%s3 + $0x88] sm:$0xff]
          %v2376 = vld [vmem:[%s3 + $0x90] sm:$0xff]
          %v2377 = vld [vmem:[%s3 + $0x98] sm:$0xff]
          %v2378 = vld [vmem:[%s3 + $0xa0] sm:$0xff]
          %v2379 = vld [vmem:[%s3 + $0xa8] sm:$0xff]
          %v2380 = vld [vmem:[%s3 + $0xb0] sm:$0xff]
          %v2381 = vld [vmem:[%s3 + $0xb8] sm:$0xff]
          %v2382 = vld [vmem:[%s3 + $0xc0] sm:$0xff]
          %v2383 = vld [vmem:[%s3 + $0xc8] sm:$0xff]
          %v2384 = vld [vmem:[%s3 + $0xd0] sm:$0xff]
          %v2385 = vld [vmem:[%s3 + $0xd8] sm:$0xff]
          %v2386 = vld [vmem:[%s3 + $0xe0] sm:$0xff]
          %v2387 = vld [vmem:[%s3 + $0xe8] sm:$0xff]
          %v2388 = vld [vmem:[%s3 + $0xf0] sm:$0xff]
          %v2389 = vld [vmem:[%s3 + $0xf8] sm:$0xff]
          %v2390 = vld [vmem:[%s4] sm:$0x1]
          %v2392 = vlaneseq
          %v2393 = vshrl.u32 %v2392, 7
          %v2394 = vsub.s32 0, %v2393
          %v2395 = vrot.slane %v2357, %v2394
          %v2396 = vlaneseq
          %v2397 = vshrl.u32 %v2396, 7
          %v2398 = vsub.s32 1, %v2397
          %v2399 = vrot.slane %v2357, %v2398
          %2402 = vmatprep.subr.mxu0 0.0
          %2403 = vmatpush1.msra.mxu0 %v2358
          %2404 = vmatprep.subr.mxu0 0.0
          %2405 = vmatpush1.msra.mxu0 %v2359
          %2406 = vmatprep.subr.mxu0 0.0
          %2407 = vmatpush1.msra.mxu0 %v2360
          %2408 = vmatprep.subr.mxu0 0.0
          %2409 = vmatpush1.msra.mxu0 %v2361
          %2410 = vmatprep.subr.mxu0 0.0
          %2411 = vmatpush1.msra.mxu0 %v2362
          %2412 = vmatprep.subr.mxu0 0.0
          %2413 = vmatpush1.msra.mxu0 %v2363
          %2414 = vmatprep.subr.mxu0 0.0
          %2415 = vmatpush1.msra.mxu0 %v2364
          %2416 = vmatprep.subr.mxu0 0.0
          %2417 = vmatpush1.msra.mxu0 %v2365
          %2418 = vmatprep.subr.mxu0 0.0
          %2419 = vmatpush1.msra.mxu0 %v2366
          %2420 = vmatprep.subr.mxu0 0.0
          %2421 = vmatpush1.msra.mxu0 %v2367
          %2422 = vmatprep.subr.mxu0 0.0
          %2423 = vmatpush1.msra.mxu0 %v2368
          %2424 = vmatprep.subr.mxu0 0.0
          %2425 = vmatpush1.msra.mxu0 %v2369
          %2426 = vmatprep.subr.mxu0 0.0
          %2427 = vmatpush1.msra.mxu0 %v2370
          %2428 = vmatprep.subr.mxu0 0.0
          %2429 = vmatpush1.msra.mxu0 %v2371
          %2430 = vmatprep.subr.mxu0 0.0
          %2431 = vmatpush1.msra.mxu0 %v2372
          %2432 = vmatprep.subr.mxu0 0.0
          %2433 = vmatpush1.msra.mxu0 %v2373
          %2434 = vmatprep.subr.mxu0 0.0
          %2435 = vmatpush1.msra.mxu0 %v2374
          %2436 = vmatprep.subr.mxu0 0.0
          %2437 = vmatpush1.msra.mxu0 %v2375
          %2438 = vmatprep.subr.mxu0 0.0
          %2439 = vmatpush1.msra.mxu0 %v2376
          %2440 = vmatprep.subr.mxu0 0.0
          %2441 = vmatpush1.msra.mxu0 %v2377
          %2442 = vmatprep.subr.mxu0 0.0
          %2443 = vmatpush1.msra.mxu0 %v2378
          %2444 = vmatprep.subr.mxu0 0.0
          %2445 = vmatpush1.msra.mxu0 %v2379
          %2446 = vmatprep.subr.mxu0 0.0
          %2447 = vmatpush1.msra.mxu0 %v2380
          %2448 = vmatprep.subr.mxu0 0.0
          %2449 = vmatpush1.msra.mxu0 %v2381
          %2450 = vmatprep.subr.mxu0 0.0
          %2451 = vmatpush1.msra.mxu0 %v2382
          %2452 = vmatprep.subr.mxu0 0.0
          %2453 = vmatpush1.msra.mxu0 %v2383
          %2454 = vmatprep.subr.mxu0 0.0
          %2455 = vmatpush1.msra.mxu0 %v2384
          %2456 = vmatprep.subr.mxu0 0.0
          %2457 = vmatpush1.msra.mxu0 %v2385
          %2458 = vmatprep.subr.mxu0 0.0
          %2459 = vmatpush1.msra.mxu0 %v2386
          %2460 = vmatprep.subr.mxu0 0.0
          %2461 = vmatpush1.msra.mxu0 %v2387
          %2462 = vmatprep.subr.mxu0 0.0
          %2463 = vmatpush1.msra.mxu0 %v2388
          %2464 = vmatprep.subr.mxu0 0.0
          %2465 = vmatpush1.msra.mxu0 %v2389
          %2466 = vmatprep.mubr.f32.mxu0 %v2399
          %2467 = vmatmul.mubr.f32.gmra.mrb[0].mxu0 %v2395
          %v2468 = vpop.f32.mrb[0].mxu0
          %v2469 = vadd.f32 %v2390, %v2468
          %v2470 = vpop.f32.mrb[0].mxu0
          %2471 = vdwg.mxu0
          %2472 = vst [vmem:[%s238] sm:$0x1] %v2469
        $region48: #{tpu_custom_call.1} parent=39 // pred_fallthru
          _
        %s2473 = sand.u32 %s151, 1
        %s2474 = scalar_lea.sflag [#allocation4], %s2473
        %s2475 = sand.u32 %s151, 1
        %s2476 = scalar_lea.vmem [#allocation3], %s2475
        // Predicated region
        $region49: #{tpu_custom_call.1} parent=39 // pred_check
          %p2477 = pneg %p161
        $region50: #{tpu_custom_call.1} parent=39 // pred_check_branch
          %2479 = sbr.rel (%p2477) target = $region52
        $region51: #{tpu_custom_call.1} parent=39 // pred_region
          %s2481 = ssub.s32 16, 16
          %2482 = vsyncadd %s2474, %s2481
          %s2483 = smul.addr %s23, 16
          %s2484 = scalar_lea.hbm %s5, %s2483
          %s2486 = sshll.u32 %s2476, 4
          %s2487 = int_to_ptr.vmem [resolvable:$true] %s2486
          %2489 = dma.vmem_to_hbm [thread:$0]  %s2487, 16, %s2484, %s2474
        $region52: #{tpu_custom_call.1} parent=39 // pred_fallthru
          _
      $region40: #{tpu_custom_call.1} parent=5 // pred_fallthru
        _
      %p2490 = scmp.le.s32.totalorder 2, %s14
      // Predicated region
      $region53: #{tpu_custom_call.1} parent=5 // pred_check
        %p2491 = pneg %p2490
      $region54: #{tpu_custom_call.1} parent=5 // pred_check_branch
        %2493 = sbr.rel (%p2491) target = $region56
      $region55: #{tpu_custom_call.1} parent=5 // pred_region
        %s2494 = ssub.s32 %s14, 2
        // Predicated region
        $region57: #{tpu_custom_call.1} parent=55 // pred_check
          %p2495 = pneg %p167
        $region58: #{tpu_custom_call.1} parent=55 // pred_check_branch
          %2497 = sbr.rel (%p2495) target = $region60
        $region59: #{tpu_custom_call.1} parent=55 // pred_region
          %s2498 = sand.u32 %s152, 1
          %s2499 = scalar_lea.sflag [#allocation4], %s2498
          %s2500 = sand.u32 %s152, 1
          %s2501 = scalar_lea.vmem [#allocation3], %s2500
          %2502 = dma.done %s2499, 16
        $region60: #{tpu_custom_call.1} parent=55 // pred_fallthru
          _
      $region56: #{tpu_custom_call.1} parent=5 // pred_fallthru
        _
    $region6: #{tpu_custom_call.1} parent=1 // loop_footer
      %s18 = sadd.s32 1, %s14
    $region7: #{tpu_custom_call.1} parent=1 // loop_footer_branch
      %13 = sbr.rel target = $region3
    $region8: #{tpu_custom_call.1} parent=1 // loop_exit
      _
    %2503 = vsyncpa [#allocation4], 1
    %s2504 = scalar_lea.sflag [#allocation4], 1
    %2505 = vsyncpa %s2504, 1

</llo_original>
